<compile_context>
chip_gen: v6e
topology: v6e:2x2x1
jax: 0.10.0
libtpu: 0.0.40
codegen_flags: <defaults>
</compile_context>

<pallas_src>
import functools

import jax
import jax.numpy as jnp
from jax import lax
from jax.experimental import pallas as pl
from jax.experimental.pallas import tpu as pltpu

NEG_SLOPE = 0.01      # nn.LeakyReLU() default negative_slope
_LANES = 128
_SUBLANES = 8


def _round_up(x, m):
    return (x + m - 1) // m * m


def _fused_cnn3_kernel(x_ref, mask_ref, w1_ref, b1_ref, w2_ref, b2_ref,
                       w3_ref, b3_ref, o_ref, col_ref, *, W):
    """One batch element: three fused (3x3 'same' conv + bias + LeakyReLU).

    x_ref   : (1, C1_pad, P_pad)   zero-padded input (halo, channel & lane pad == 0)
    mask_ref: (1, P_pad)           1.0 on interior pixels, 0.0 on halo / lane pad
    w*_ref  : (Co_pad, 9*Ci_pad)   packed weights (rows=out-chan, cols=tap-major/chan-minor)
    b*_ref  : (Co_pad, 1)
    o_ref   : (1, Co_pad, P_pad)   output in padded layout (wrapper slices interior)
    col_ref : (9*Cmax_pad, P_pad)  VMEM scratch: stacked shifted taps (im2col)
    """
    Wp = W + 2
    P_pad = col_ref.shape[1]
    interior = mask_ref[...]                      # (1, P_pad), broadcasts over channels

    # Tap offsets in flattened padded coordinates. Outputs are produced at their
    # own padded positions, so each layer's (masked) result is directly the next
    # layer's zero-padded input.
    offs = [(dy - 1) * Wp + (dx - 1) for dy in range(3) for dx in range(3)]

    def conv3x3_bias_lrelu(src, w, b, mask_halo=True):
        # src: (Ci_pad, P_pad) zero-padded activations (halo == 0, lane pad == 0).
        ci_pad = src.shape[0]
        # Build the im2col matrix with 9 lane rolls (XLU) stacked along the
        # contraction dim -- no per-tap strided slice+reshape materializations.
        for t, off in enumerate(offs):
            tap = src if off == 0 else pltpu.roll(src, shift=(-off) % P_pad, axis=1)
            col_ref[t * ci_pad:(t + 1) * ci_pad, :] = tap
        stacked = col_ref[0:9 * ci_pad, :]                    # (9*Ci_pad, P_pad)
        # Single MXU matmul per layer, f32 accumulation, lane-dense N = P_pad.
        acc = jnp.dot(w, stacked, preferred_element_type=jnp.float32) + b
        acc = jnp.where(acc >= 0, acc, NEG_SLOPE * acc)       # LeakyReLU
        # Keep halo/lane-pad at exactly 0 so the result is the next layer's
        # padded input. The final layer skips this (wrapper slices interior).
        return acc * interior if mask_halo else acc

    a = conv3x3_bias_lrelu(x_ref[0], w1_ref[...], b1_ref[...])
    a = conv3x3_bias_lrelu(a, w2_ref[...], b2_ref[...])
    a = conv3x3_bias_lrelu(a, w3_ref[...], b3_ref[...], mask_halo=False)
    o_ref[0] = a.astype(o_ref.dtype)


def _pack_conv(w_hwio, b, ci_pad, co_pad):
    """HWIO (3,3,Ci,Co) conv weights -> (Co_pad, 9*Ci_pad) matrix + (Co_pad,1) bias."""
    kh, kw, ci, co = w_hwio.shape
    w = jnp.pad(w_hwio, ((0, 0), (0, 0), (0, ci_pad - ci), (0, co_pad - co)))
    w_mat = w.reshape(kh * kw * ci_pad, co_pad).T   # rows: tap-major, channel-minor
    b_col = jnp.pad(b, (0, co_pad - co)).reshape(co_pad, 1)
    return w_mat, b_col


@jax.jit
def cnn_layer_forward(x_nchw, params):
    """CNN_layer.forward: three conv3x3(same) + LeakyReLU. NCHW in / NCHW out."""
    (w1, b1), (w2, b2), (w3, b3) = params
    N, Cin, H, W = x_nchw.shape
    Cmid = w1.shape[-1]
    Cout = w3.shape[-1]

    c1p = _round_up(Cin, _SUBLANES)
    c2p = _round_up(Cmid, _SUBLANES)
    c3p = _round_up(Cout, _SUBLANES)
    Hp, Wp = H + 2, W + 2
    P = Hp * Wp
    P_pad = _round_up(P, _LANES)

    # Pack weights/bias once per call (tiny); activations stay in VMEM between layers.
    w1m, b1c = _pack_conv(w1, b1, c1p, c2p)
    w2m, b2c = _pack_conv(w2, b2, c2p, c2p)
    w3m, b3c = _pack_conv(w3, b3, c2p, c3p)

    # Lane-dense, zero-padded input layout: (N, C1_pad, (H+2)*(W+2) -> lane pad).
    # One cheap XLA pad outside the kernel -> dense, unmasked DMA and vregs inside.
    x_pad = jnp.pad(x_nchw.astype(jnp.float32),
                    ((0, 0), (0, c1p - Cin), (1, 1), (1, 1))).reshape(N, c1p, P)
    x_pad = jnp.pad(x_pad, ((0, 0), (0, 0), (0, P_pad - P)))

    # Constant interior mask in the padded/flattened layout (folded by XLA).
    mask = jnp.pad(jnp.ones((H, W), jnp.float32), ((1, 1), (1, 1))).reshape(1, P)
    mask = jnp.pad(mask, ((0, 0), (0, P_pad - P)))

    kernel = functools.partial(_fused_cnn3_kernel, W=W)

    out_flat = pl.pallas_call(
        kernel,
        out_shape=jax.ShapeDtypeStruct((N, c3p, P_pad), x_nchw.dtype),
        grid_spec=pltpu.PrefetchScalarGridSpec(
            num_scalar_prefetch=0,
            grid=(N,),
            in_specs=[
                pl.BlockSpec((1, c1p, P_pad), lambda n: (n, 0, 0)),
                pl.BlockSpec((1, P_pad), lambda n: (0, 0)),
                pl.BlockSpec(w1m.shape, lambda n: (0, 0)),
                pl.BlockSpec(b1c.shape, lambda n: (0, 0)),
                pl.BlockSpec(w2m.shape, lambda n: (0, 0)),
                pl.BlockSpec(b2c.shape, lambda n: (0, 0)),
                pl.BlockSpec(w3m.shape, lambda n: (0, 0)),
                pl.BlockSpec(b3c.shape, lambda n: (0, 0)),
            ],
            out_specs=pl.BlockSpec((1, c3p, P_pad), lambda n: (n, 0, 0)),
            scratch_shapes=[
                pltpu.VMEM((9 * max(c1p, c2p), P_pad), jnp.float32),  # im2col stack
            ],
        ),
        compiler_params=pltpu.CompilerParams(
            dimension_semantics=("parallel",)),   # batch axis -> both TCs on v7x
    )(x_pad, mask, w1m, b1c, w2m, b2c, w3m, b3c)

    # Drop channel / lane padding, slice away the spatial halo -> NCHW output.
    out = out_flat[:, :Cout, :P].reshape(N, Cout, Hp, Wp)
    return out[:, :, 1:H + 1, 1:W + 1]


def init_conv_params(key, in_ch, out_ch):
    """Deterministic PyTorch-like Conv2d init. Returns HWIO weights (3,3,Ci,Co), bias (Co,)."""
    kw_, kb = jax.random.split(key)
    fan_in = in_ch * 3 * 3
    bound = 1.0 / jnp.sqrt(fan_in)
    w_hwio = jax.random.uniform(kw_, (3, 3, in_ch, out_ch), jnp.float32,
                                minval=-bound, maxval=bound)
    b = jax.random.uniform(kb, (out_ch,), jnp.float32, minval=-bound, maxval=bound)
    return w_hwio, b


def reference_forward(x_nchw, params):
    """Pure-JAX reference (lax.conv) for the correctness check."""
    x = x_nchw
    for w_hwio, b in params:
        cout = w_hwio.shape[-1]
        y = lax.conv_general_dilated(
            x, w_hwio, window_strides=(1, 1), padding="SAME",
            dimension_numbers=("NCHW", "HWIO", "NCHW"))
        y = y + b.reshape(1, cout, 1, 1)
        x = jnp.where(y >= 0, y, NEG_SLOPE * y)
    return x


if __name__ == "__main__":
    key = jax.random.PRNGKey(0)
    k_x, k1, k2, k3 = jax.random.split(key, 4)

    # Small shapes: batch=2, in_channel=4, mid=out=4, spatial 16x16.
    N, Cin, H, W = 2, 4, 16, 16
    Cmid = Cout = 4

    x = jax.random.normal(k_x, (N, Cin, H, W), jnp.float32)
    params = (
        init_conv_params(k1, Cin, Cmid),    # conv1
        init_conv_params(k2, Cmid, Cmid),   # conv2
        init_conv_params(k3, Cmid, Cout),   # conv3
    )

    out = jax.block_until_ready(cnn_layer_forward(x, params))
    ref = reference_forward(x, params)

    assert out.shape == (N, Cout, H, W)
    assert jnp.allclose(out, ref, rtol=1e-4, atol=1e-4), (
        "max abs err = %f" % float(jnp.max(jnp.abs(out - ref))))

    print("KERNEL_OK")
</pallas_src>

<mosaic_0001>
module attributes {stable_mosaic.version = 11 : i64} {
  func.func @_fused_cnn3_kernel(%arg0: i32, %arg1: memref<1x8x384xf32, #tpu.memory_space<vmem>>, %arg2: memref<1x384xf32, #tpu.memory_space<vmem>>, %arg3: memref<8x72xf32, #tpu.memory_space<vmem>>, %arg4: memref<8x1xf32, #tpu.memory_space<vmem>>, %arg5: memref<8x72xf32, #tpu.memory_space<vmem>>, %arg6: memref<8x1xf32, #tpu.memory_space<vmem>>, %arg7: memref<8x72xf32, #tpu.memory_space<vmem>>, %arg8: memref<8x1xf32, #tpu.memory_space<vmem>>, %arg9: memref<1x8x384xf32, #tpu.memory_space<vmem>>, %arg10: memref<72x384xf32, #tpu.memory_space<vmem>>) attributes {dimension_semantics = [#tpu.dimension_semantics<parallel>], iteration_bounds = array<i64: 2>, scalar_prefetch = 0 : i64, scratch_operands = 1 : i64, tpu.core_type = #tpu.core_type<tc>, window_params = [{transform_indices = @transform_0, window_bounds = array<i64: 1, 8, 384>}, {pipeline_mode = #tpu.pipeline_mode<synchronous>, transform_indices = @transform_1, window_bounds = array<i64: 1, 384>}, {pipeline_mode = #tpu.pipeline_mode<synchronous>, transform_indices = @transform_2, window_bounds = array<i64: 8, 72>}, {pipeline_mode = #tpu.pipeline_mode<synchronous>, transform_indices = @transform_3, window_bounds = array<i64: 8, 1>}, {pipeline_mode = #tpu.pipeline_mode<synchronous>, transform_indices = @transform_4, window_bounds = array<i64: 8, 72>}, {pipeline_mode = #tpu.pipeline_mode<synchronous>, transform_indices = @transform_5, window_bounds = array<i64: 8, 1>}, {pipeline_mode = #tpu.pipeline_mode<synchronous>, transform_indices = @transform_6, window_bounds = array<i64: 8, 72>}, {pipeline_mode = #tpu.pipeline_mode<synchronous>, transform_indices = @transform_7, window_bounds = array<i64: 8, 1>}, {transform_indices = @transform_8, window_bounds = array<i64: 1, 8, 384>}]} {
    %c0 = arith.constant 0 : index
    %c0_0 = arith.constant 0 : index
    %0 = vector.load %arg2[%c0, %c0_0] : memref<1x384xf32, #tpu.memory_space<vmem>>, vector<1x384xf32>
    %c0_1 = arith.constant 0 : index
    %c0_2 = arith.constant 0 : index
    %c0_3 = arith.constant 0 : index
    %1 = vector.load %arg1[%c0_1, %c0_2, %c0_3] : memref<1x8x384xf32, #tpu.memory_space<vmem>>, vector<1x8x384xf32>
    %2 = vector.shape_cast %1 : vector<1x8x384xf32> to vector<8x384xf32>
    %c0_4 = arith.constant 0 : index
    %c0_5 = arith.constant 0 : index
    %3 = vector.load %arg3[%c0_4, %c0_5] : memref<8x72xf32, #tpu.memory_space<vmem>>, vector<8x72xf32>
    %c0_6 = arith.constant 0 : index
    %c0_7 = arith.constant 0 : index
    %4 = vector.load %arg4[%c0_6, %c0_7] : memref<8x1xf32, #tpu.memory_space<vmem>>, vector<8x1xf32>
    %c19_i32 = arith.constant 19 : i32
    %5 = tpu.dynamic_rotate %2 by %c19_i32 dim 1 : vector<8x384xf32>, i32 -> vector<8x384xf32>
    %c0_8 = arith.constant 0 : index
    %c0_9 = arith.constant 0 : index
    %6 = vector.load %arg10[%c0_8, %c0_9] : memref<72x384xf32, #tpu.memory_space<vmem>>, vector<8x384xf32>
    tpu.vector_store %arg10[%c0_8, %c0_9], %5 {strides = array<i32>} : memref<72x384xf32, #tpu.memory_space<vmem>>, vector<8x384xf32>,
    %c18_i32 = arith.constant 18 : i32
    %7 = tpu.dynamic_rotate %2 by %c18_i32 dim 1 : vector<8x384xf32>, i32 -> vector<8x384xf32>
    %c8 = arith.constant 8 : index
    %c0_10 = arith.constant 0 : index
    %8 = vector.load %arg10[%c8, %c0_10] : memref<72x384xf32, #tpu.memory_space<vmem>>, vector<8x384xf32>
    tpu.vector_store %arg10[%c8, %c0_10], %7 {strides = array<i32>} : memref<72x384xf32, #tpu.memory_space<vmem>>, vector<8x384xf32>,
    %c17_i32 = arith.constant 17 : i32
    %9 = tpu.dynamic_rotate %2 by %c17_i32 dim 1 : vector<8x384xf32>, i32 -> vector<8x384xf32>
    %c16 = arith.constant 16 : index
    %c0_11 = arith.constant 0 : index
    %10 = vector.load %arg10[%c16, %c0_11] : memref<72x384xf32, #tpu.memory_space<vmem>>, vector<8x384xf32>
    tpu.vector_store %arg10[%c16, %c0_11], %9 {strides = array<i32>} : memref<72x384xf32, #tpu.memory_space<vmem>>, vector<8x384xf32>,
    %c1_i32 = arith.constant 1 : i32
    %11 = tpu.dynamic_rotate %2 by %c1_i32 dim 1 : vector<8x384xf32>, i32 -> vector<8x384xf32>
    %c24 = arith.constant 24 : index
    %c0_12 = arith.constant 0 : index
    %12 = vector.load %arg10[%c24, %c0_12] : memref<72x384xf32, #tpu.memory_space<vmem>>, vector<8x384xf32>
    tpu.vector_store %arg10[%c24, %c0_12], %11 {strides = array<i32>} : memref<72x384xf32, #tpu.memory_space<vmem>>, vector<8x384xf32>,
    %c32 = arith.constant 32 : index
    %c0_13 = arith.constant 0 : index
    %13 = vector.load %arg10[%c32, %c0_13] : memref<72x384xf32, #tpu.memory_space<vmem>>, vector<8x384xf32>
    tpu.vector_store %arg10[%c32, %c0_13], %2 {strides = array<i32>} : memref<72x384xf32, #tpu.memory_space<vmem>>, vector<8x384xf32>,
    %c383_i32 = arith.constant 383 : i32
    %14 = tpu.dynamic_rotate %2 by %c383_i32 dim 1 : vector<8x384xf32>, i32 -> vector<8x384xf32>
    %c40 = arith.constant 40 : index
    %c0_14 = arith.constant 0 : index
    %15 = vector.load %arg10[%c40, %c0_14] : memref<72x384xf32, #tpu.memory_space<vmem>>, vector<8x384xf32>
    tpu.vector_store %arg10[%c40, %c0_14], %14 {strides = array<i32>} : memref<72x384xf32, #tpu.memory_space<vmem>>, vector<8x384xf32>,
    %c367_i32 = arith.constant 367 : i32
    %16 = tpu.dynamic_rotate %2 by %c367_i32 dim 1 : vector<8x384xf32>, i32 -> vector<8x384xf32>
    %c48 = arith.constant 48 : index
    %c0_15 = arith.constant 0 : index
    %17 = vector.load %arg10[%c48, %c0_15] : memref<72x384xf32, #tpu.memory_space<vmem>>, vector<8x384xf32>
    tpu.vector_store %arg10[%c48, %c0_15], %16 {strides = array<i32>} : memref<72x384xf32, #tpu.memory_space<vmem>>, vector<8x384xf32>,
    %c366_i32 = arith.constant 366 : i32
    %18 = tpu.dynamic_rotate %2 by %c366_i32 dim 1 : vector<8x384xf32>, i32 -> vector<8x384xf32>
    %c56 = arith.constant 56 : index
    %c0_16 = arith.constant 0 : index
    %19 = vector.load %arg10[%c56, %c0_16] : memref<72x384xf32, #tpu.memory_space<vmem>>, vector<8x384xf32>
    tpu.vector_store %arg10[%c56, %c0_16], %18 {strides = array<i32>} : memref<72x384xf32, #tpu.memory_space<vmem>>, vector<8x384xf32>,
    %c365_i32 = arith.constant 365 : i32
    %20 = tpu.dynamic_rotate %2 by %c365_i32 dim 1 : vector<8x384xf32>, i32 -> vector<8x384xf32>
    %c64 = arith.constant 64 : index
    %c0_17 = arith.constant 0 : index
    %21 = vector.load %arg10[%c64, %c0_17] : memref<72x384xf32, #tpu.memory_space<vmem>>, vector<8x384xf32>
    tpu.vector_store %arg10[%c64, %c0_17], %20 {strides = array<i32>} : memref<72x384xf32, #tpu.memory_space<vmem>>, vector<8x384xf32>,
    %c0_18 = arith.constant 0 : index
    %c0_19 = arith.constant 0 : index
    %22 = vector.load %arg10[%c0_18, %c0_19] : memref<72x384xf32, #tpu.memory_space<vmem>>, vector<72x384xf32>
    %cst = arith.constant dense<0.000000e+00> : vector<8x384xf32>
    %23 = tpu.matmul %3, %22, %cst {dimension_numbers = #tpu.dot_dimension_numbers<[1], [0], [0], [1], [0, 0, 1, 1], [], []>} : vector<8x72xf32>, vector<72x384xf32>, vector<8x384xf32> -> vector<8x384xf32>
    %24 = vector.broadcast %4 : vector<8x1xf32> to vector<8x384xf32>
    %25 = arith.addf %23, %24 : vector<8x384xf32>
    %cst_20 = arith.constant 0.000000e+00 : f32
    %26 = vector.broadcast %cst_20 : f32 to vector<8x384xf32>
    %27 = arith.cmpf oge, %25, %26 : vector<8x384xf32>
    %cst_21 = arith.constant 0.00999999977 : f32
    %28 = vector.broadcast %cst_21 : f32 to vector<8x384xf32>
    %29 = arith.mulf %28, %25 : vector<8x384xf32>
    %30 = arith.select %27, %25, %29 : vector<8x384xi1>, vector<8x384xf32>
    %31 = vector.broadcast %0 : vector<1x384xf32> to vector<8x384xf32>
    %32 = arith.mulf %30, %31 : vector<8x384xf32>
    %c0_22 = arith.constant 0 : index
    %c0_23 = arith.constant 0 : index
    %33 = vector.load %arg5[%c0_22, %c0_23] : memref<8x72xf32, #tpu.memory_space<vmem>>, vector<8x72xf32>
    %c0_24 = arith.constant 0 : index
    %c0_25 = arith.constant 0 : index
    %34 = vector.load %arg6[%c0_24, %c0_25] : memref<8x1xf32, #tpu.memory_space<vmem>>, vector<8x1xf32>
    %c19_i32_26 = arith.constant 19 : i32
    %35 = tpu.dynamic_rotate %32 by %c19_i32_26 dim 1 : vector<8x384xf32>, i32 -> vector<8x384xf32>
    %c0_27 = arith.constant 0 : index
    %c0_28 = arith.constant 0 : index
    %36 = vector.load %arg10[%c0_27, %c0_28] : memref<72x384xf32, #tpu.memory_space<vmem>>, vector<8x384xf32>
    tpu.vector_store %arg10[%c0_27, %c0_28], %35 {strides = array<i32>} : memref<72x384xf32, #tpu.memory_space<vmem>>, vector<8x384xf32>,
    %c18_i32_29 = arith.constant 18 : i32
    %37 = tpu.dynamic_rotate %32 by %c18_i32_29 dim 1 : vector<8x384xf32>, i32 -> vector<8x384xf32>
    %c8_30 = arith.constant 8 : index
    %c0_31 = arith.constant 0 : index
    %38 = vector.load %arg10[%c8_30, %c0_31] : memref<72x384xf32, #tpu.memory_space<vmem>>, vector<8x384xf32>
    tpu.vector_store %arg10[%c8_30, %c0_31], %37 {strides = array<i32>} : memref<72x384xf32, #tpu.memory_space<vmem>>, vector<8x384xf32>,
    %c17_i32_32 = arith.constant 17 : i32
    %39 = tpu.dynamic_rotate %32 by %c17_i32_32 dim 1 : vector<8x384xf32>, i32 -> vector<8x384xf32>
    %c16_33 = arith.constant 16 : index
    %c0_34 = arith.constant 0 : index
    %40 = vector.load %arg10[%c16_33, %c0_34] : memref<72x384xf32, #tpu.memory_space<vmem>>, vector<8x384xf32>
    tpu.vector_store %arg10[%c16_33, %c0_34], %39 {strides = array<i32>} : memref<72x384xf32, #tpu.memory_space<vmem>>, vector<8x384xf32>,
    %c1_i32_35 = arith.constant 1 : i32
    %41 = tpu.dynamic_rotate %32 by %c1_i32_35 dim 1 : vector<8x384xf32>, i32 -> vector<8x384xf32>
    %c24_36 = arith.constant 24 : index
    %c0_37 = arith.constant 0 : index
    %42 = vector.load %arg10[%c24_36, %c0_37] : memref<72x384xf32, #tpu.memory_space<vmem>>, vector<8x384xf32>
    tpu.vector_store %arg10[%c24_36, %c0_37], %41 {strides = array<i32>} : memref<72x384xf32, #tpu.memory_space<vmem>>, vector<8x384xf32>,
    %c32_38 = arith.constant 32 : index
    %c0_39 = arith.constant 0 : index
    %43 = vector.load %arg10[%c32_38, %c0_39] : memref<72x384xf32, #tpu.memory_space<vmem>>, vector<8x384xf32>
    tpu.vector_store %arg10[%c32_38, %c0_39], %32 {strides = array<i32>} : memref<72x384xf32, #tpu.memory_space<vmem>>, vector<8x384xf32>,
    %c383_i32_40 = arith.constant 383 : i32
    %44 = tpu.dynamic_rotate %32 by %c383_i32_40 dim 1 : vector<8x384xf32>, i32 -> vector<8x384xf32>
    %c40_41 = arith.constant 40 : index
    %c0_42 = arith.constant 0 : index
    %45 = vector.load %arg10[%c40_41, %c0_42] : memref<72x384xf32, #tpu.memory_space<vmem>>, vector<8x384xf32>
    tpu.vector_store %arg10[%c40_41, %c0_42], %44 {strides = array<i32>} : memref<72x384xf32, #tpu.memory_space<vmem>>, vector<8x384xf32>,
    %c367_i32_43 = arith.constant 367 : i32
    %46 = tpu.dynamic_rotate %32 by %c367_i32_43 dim 1 : vector<8x384xf32>, i32 -> vector<8x384xf32>
    %c48_44 = arith.constant 48 : index
    %c0_45 = arith.constant 0 : index
    %47 = vector.load %arg10[%c48_44, %c0_45] : memref<72x384xf32, #tpu.memory_space<vmem>>, vector<8x384xf32>
    tpu.vector_store %arg10[%c48_44, %c0_45], %46 {strides = array<i32>} : memref<72x384xf32, #tpu.memory_space<vmem>>, vector<8x384xf32>,
    %c366_i32_46 = arith.constant 366 : i32
    %48 = tpu.dynamic_rotate %32 by %c366_i32_46 dim 1 : vector<8x384xf32>, i32 -> vector<8x384xf32>
    %c56_47 = arith.constant 56 : index
    %c0_48 = arith.constant 0 : index
    %49 = vector.load %arg10[%c56_47, %c0_48] : memref<72x384xf32, #tpu.memory_space<vmem>>, vector<8x384xf32>
    tpu.vector_store %arg10[%c56_47, %c0_48], %48 {strides = array<i32>} : memref<72x384xf32, #tpu.memory_space<vmem>>, vector<8x384xf32>,
    %c365_i32_49 = arith.constant 365 : i32
    %50 = tpu.dynamic_rotate %32 by %c365_i32_49 dim 1 : vector<8x384xf32>, i32 -> vector<8x384xf32>
    %c64_50 = arith.constant 64 : index
    %c0_51 = arith.constant 0 : index
    %51 = vector.load %arg10[%c64_50, %c0_51] : memref<72x384xf32, #tpu.memory_space<vmem>>, vector<8x384xf32>
    tpu.vector_store %arg10[%c64_50, %c0_51], %50 {strides = array<i32>} : memref<72x384xf32, #tpu.memory_space<vmem>>, vector<8x384xf32>,
    %c0_52 = arith.constant 0 : index
    %c0_53 = arith.constant 0 : index
    %52 = vector.load %arg10[%c0_52, %c0_53] : memref<72x384xf32, #tpu.memory_space<vmem>>, vector<72x384xf32>
    %cst_54 = arith.constant dense<0.000000e+00> : vector<8x384xf32>
    %53 = tpu.matmul %33, %52, %cst_54 {dimension_numbers = #tpu.dot_dimension_numbers<[1], [0], [0], [1], [0, 0, 1, 1], [], []>} : vector<8x72xf32>, vector<72x384xf32>, vector<8x384xf32> -> vector<8x384xf32>
    %54 = vector.broadcast %34 : vector<8x1xf32> to vector<8x384xf32>
    %55 = arith.addf %53, %54 : vector<8x384xf32>
    %cst_55 = arith.constant 0.000000e+00 : f32
    %56 = vector.broadcast %cst_55 : f32 to vector<8x384xf32>
    %57 = arith.cmpf oge, %55, %56 : vector<8x384xf32>
    %cst_56 = arith.constant 0.00999999977 : f32
    %58 = vector.broadcast %cst_56 : f32 to vector<8x384xf32>
    %59 = arith.mulf %58, %55 : vector<8x384xf32>
    %60 = arith.select %57, %55, %59 : vector<8x384xi1>, vector<8x384xf32>
    %61 = vector.broadcast %0 : vector<1x384xf32> to vector<8x384xf32>
    %62 = arith.mulf %60, %61 : vector<8x384xf32>
    %c0_57 = arith.constant 0 : index
    %c0_58 = arith.constant 0 : index
    %63 = vector.load %arg7[%c0_57, %c0_58] : memref<8x72xf32, #tpu.memory_space<vmem>>, vector<8x72xf32>
    %c0_59 = arith.constant 0 : index
    %c0_60 = arith.constant 0 : index
    %64 = vector.load %arg8[%c0_59, %c0_60] : memref<8x1xf32, #tpu.memory_space<vmem>>, vector<8x1xf32>
    %c19_i32_61 = arith.constant 19 : i32
    %65 = tpu.dynamic_rotate %62 by %c19_i32_61 dim 1 : vector<8x384xf32>, i32 -> vector<8x384xf32>
    %c0_62 = arith.constant 0 : index
    %c0_63 = arith.constant 0 : index
    %66 = vector.load %arg10[%c0_62, %c0_63] : memref<72x384xf32, #tpu.memory_space<vmem>>, vector<8x384xf32>
    tpu.vector_store %arg10[%c0_62, %c0_63], %65 {strides = array<i32>} : memref<72x384xf32, #tpu.memory_space<vmem>>, vector<8x384xf32>,
    %c18_i32_64 = arith.constant 18 : i32
    %67 = tpu.dynamic_rotate %62 by %c18_i32_64 dim 1 : vector<8x384xf32>, i32 -> vector<8x384xf32>
    %c8_65 = arith.constant 8 : index
    %c0_66 = arith.constant 0 : index
    %68 = vector.load %arg10[%c8_65, %c0_66] : memref<72x384xf32, #tpu.memory_space<vmem>>, vector<8x384xf32>
    tpu.vector_store %arg10[%c8_65, %c0_66], %67 {strides = array<i32>} : memref<72x384xf32, #tpu.memory_space<vmem>>, vector<8x384xf32>,
    %c17_i32_67 = arith.constant 17 : i32
    %69 = tpu.dynamic_rotate %62 by %c17_i32_67 dim 1 : vector<8x384xf32>, i32 -> vector<8x384xf32>
    %c16_68 = arith.constant 16 : index
    %c0_69 = arith.constant 0 : index
    %70 = vector.load %arg10[%c16_68, %c0_69] : memref<72x384xf32, #tpu.memory_space<vmem>>, vector<8x384xf32>
    tpu.vector_store %arg10[%c16_68, %c0_69], %69 {strides = array<i32>} : memref<72x384xf32, #tpu.memory_space<vmem>>, vector<8x384xf32>,
    %c1_i32_70 = arith.constant 1 : i32
    %71 = tpu.dynamic_rotate %62 by %c1_i32_70 dim 1 : vector<8x384xf32>, i32 -> vector<8x384xf32>
    %c24_71 = arith.constant 24 : index
    %c0_72 = arith.constant 0 : index
    %72 = vector.load %arg10[%c24_71, %c0_72] : memref<72x384xf32, #tpu.memory_space<vmem>>, vector<8x384xf32>
    tpu.vector_store %arg10[%c24_71, %c0_72], %71 {strides = array<i32>} : memref<72x384xf32, #tpu.memory_space<vmem>>, vector<8x384xf32>,
    %c32_73 = arith.constant 32 : index
    %c0_74 = arith.constant 0 : index
    %73 = vector.load %arg10[%c32_73, %c0_74] : memref<72x384xf32, #tpu.memory_space<vmem>>, vector<8x384xf32>
    tpu.vector_store %arg10[%c32_73, %c0_74], %62 {strides = array<i32>} : memref<72x384xf32, #tpu.memory_space<vmem>>, vector<8x384xf32>,
    %c383_i32_75 = arith.constant 383 : i32
    %74 = tpu.dynamic_rotate %62 by %c383_i32_75 dim 1 : vector<8x384xf32>, i32 -> vector<8x384xf32>
    %c40_76 = arith.constant 40 : index
    %c0_77 = arith.constant 0 : index
    %75 = vector.load %arg10[%c40_76, %c0_77] : memref<72x384xf32, #tpu.memory_space<vmem>>, vector<8x384xf32>
    tpu.vector_store %arg10[%c40_76, %c0_77], %74 {strides = array<i32>} : memref<72x384xf32, #tpu.memory_space<vmem>>, vector<8x384xf32>,
    %c367_i32_78 = arith.constant 367 : i32
    %76 = tpu.dynamic_rotate %62 by %c367_i32_78 dim 1 : vector<8x384xf32>, i32 -> vector<8x384xf32>
    %c48_79 = arith.constant 48 : index
    %c0_80 = arith.constant 0 : index
    %77 = vector.load %arg10[%c48_79, %c0_80] : memref<72x384xf32, #tpu.memory_space<vmem>>, vector<8x384xf32>
    tpu.vector_store %arg10[%c48_79, %c0_80], %76 {strides = array<i32>} : memref<72x384xf32, #tpu.memory_space<vmem>>, vector<8x384xf32>,
    %c366_i32_81 = arith.constant 366 : i32
    %78 = tpu.dynamic_rotate %62 by %c366_i32_81 dim 1 : vector<8x384xf32>, i32 -> vector<8x384xf32>
    %c56_82 = arith.constant 56 : index
    %c0_83 = arith.constant 0 : index
    %79 = vector.load %arg10[%c56_82, %c0_83] : memref<72x384xf32, #tpu.memory_space<vmem>>, vector<8x384xf32>
    tpu.vector_store %arg10[%c56_82, %c0_83], %78 {strides = array<i32>} : memref<72x384xf32, #tpu.memory_space<vmem>>, vector<8x384xf32>,
    %c365_i32_84 = arith.constant 365 : i32
    %80 = tpu.dynamic_rotate %62 by %c365_i32_84 dim 1 : vector<8x384xf32>, i32 -> vector<8x384xf32>
    %c64_85 = arith.constant 64 : index
    %c0_86 = arith.constant 0 : index
    %81 = vector.load %arg10[%c64_85, %c0_86] : memref<72x384xf32, #tpu.memory_space<vmem>>, vector<8x384xf32>
    tpu.vector_store %arg10[%c64_85, %c0_86], %80 {strides = array<i32>} : memref<72x384xf32, #tpu.memory_space<vmem>>, vector<8x384xf32>,
    %c0_87 = arith.constant 0 : index
    %c0_88 = arith.constant 0 : index
    %82 = vector.load %arg10[%c0_87, %c0_88] : memref<72x384xf32, #tpu.memory_space<vmem>>, vector<72x384xf32>
    %cst_89 = arith.constant dense<0.000000e+00> : vector<8x384xf32>
    %83 = tpu.matmul %63, %82, %cst_89 {dimension_numbers = #tpu.dot_dimension_numbers<[1], [0], [0], [1], [0, 0, 1, 1], [], []>} : vector<8x72xf32>, vector<72x384xf32>, vector<8x384xf32> -> vector<8x384xf32>
    %84 = vector.broadcast %64 : vector<8x1xf32> to vector<8x384xf32>
    %85 = arith.addf %83, %84 : vector<8x384xf32>
    %cst_90 = arith.constant 0.000000e+00 : f32
    %86 = vector.broadcast %cst_90 : f32 to vector<8x384xf32>
    %87 = arith.cmpf oge, %85, %86 : vector<8x384xf32>
    %cst_91 = arith.constant 0.00999999977 : f32
    %88 = vector.broadcast %cst_91 : f32 to vector<8x384xf32>
    %89 = arith.mulf %88, %85 : vector<8x384xf32>
    %90 = arith.select %87, %85, %89 : vector<8x384xi1>, vector<8x384xf32>
    %c0_92 = arith.constant 0 : index
    %c0_93 = arith.constant 0 : index
    %c0_94 = arith.constant 0 : index
    %91 = vector.load %arg9[%c0_92, %c0_93, %c0_94] : memref<1x8x384xf32, #tpu.memory_space<vmem>>, vector<1x8x384xf32>
    %92 = vector.shape_cast %91 : vector<1x8x384xf32> to vector<8x384xf32>
    %93 = vector.shape_cast %90 : vector<8x384xf32> to vector<1x8x384xf32>
    tpu.vector_store %arg9[%c0_92, %c0_93, %c0_94], %93 {strides = array<i32>} : memref<1x8x384xf32, #tpu.memory_space<vmem>>, vector<1x8x384xf32>,
    return
  }
  func.func @transform_0(%arg0: i32) -> (i32, i32, i32) {
    %c0_i32 = arith.constant 0 : i32
    %c0_i32_0 = arith.constant 0 : i32
    %c0_i32_1 = arith.constant 0 : i32
    return %arg0, %c0_i32, %c0_i32_0 : i32, i32, i32
  }
  func.func @transform_1(%arg0: i32) -> (i32, i32) {
    %c0_i32 = arith.constant 0 : i32
    %c0_i32_0 = arith.constant 0 : i32
    %c0_i32_1 = arith.constant 0 : i32
    return %c0_i32, %c0_i32_0 : i32, i32
  }
  func.func @transform_2(%arg0: i32) -> (i32, i32) {
    %c0_i32 = arith.constant 0 : i32
    %c0_i32_0 = arith.constant 0 : i32
    %c0_i32_1 = arith.constant 0 : i32
    return %c0_i32, %c0_i32_0 : i32, i32
  }
  func.func @transform_3(%arg0: i32) -> (i32, i32) {
    %c0_i32 = arith.constant 0 : i32
    %c0_i32_0 = arith.constant 0 : i32
    %c0_i32_1 = arith.constant 0 : i32
    return %c0_i32, %c0_i32_0 : i32, i32
  }
  func.func @transform_4(%arg0: i32) -> (i32, i32) {
    %c0_i32 = arith.constant 0 : i32
    %c0_i32_0 = arith.constant 0 : i32
    %c0_i32_1 = arith.constant 0 : i32
    return %c0_i32, %c0_i32_0 : i32, i32
  }
  func.func @transform_5(%arg0: i32) -> (i32, i32) {
    %c0_i32 = arith.constant 0 : i32
    %c0_i32_0 = arith.constant 0 : i32
    %c0_i32_1 = arith.constant 0 : i32
    return %c0_i32, %c0_i32_0 : i32, i32
  }
  func.func @transform_6(%arg0: i32) -> (i32, i32) {
    %c0_i32 = arith.constant 0 : i32
    %c0_i32_0 = arith.constant 0 : i32
    %c0_i32_1 = arith.constant 0 : i32
    return %c0_i32, %c0_i32_0 : i32, i32
  }
  func.func @transform_7(%arg0: i32) -> (i32, i32) {
    %c0_i32 = arith.constant 0 : i32
    %c0_i32_0 = arith.constant 0 : i32
    %c0_i32_1 = arith.constant 0 : i32
    return %c0_i32, %c0_i32_0 : i32, i32
  }
  func.func @transform_8(%arg0: i32) -> (i32, i32, i32) {
    %c0_i32 = arith.constant 0 : i32
    %c0_i32_0 = arith.constant 0 : i32
    %c0_i32_1 = arith.constant 0 : i32
    return %arg0, %c0_i32, %c0_i32_0 : i32, i32, i32
  }
}

</mosaic_0001>

<llo_original>
// kernel: cnn_layer_forward.1
$region0: #{cnn_layer_forward.1}
  #allocation0 [shape = 'u32[]', space=smem, size = 0x4, offset = 0x4, fixed_abs, tag = 'smem constant byte address 0x4 - core index']
  #allocation1 [shape = 'u32[144,128]{1,0:T(1,128)}', space=vmem, size = 0x12000, scoped, tag = 'internal scratch']
  #allocation2 [shape = 'f32[72,384]{1,0:T(8,128)}', space=vmem, size = 0x1b000, scoped, tag = 'scratch operand']
  %s0 = inlined_call_operand.vmem [shape: f32[2,8,384], index: 0, kind: input, shape index: {}]
  %s1 = inlined_call_operand.vmem [shape: f32[1,384], index: 1, kind: input, shape index: {}]
  %s2 = inlined_call_operand.vmem [shape: f32[8,72], index: 2, kind: input, shape index: {}]
  %s3 = inlined_call_operand.vmem [shape: f32[8,1], index: 3, kind: input, shape index: {}]
  %s4 = inlined_call_operand.vmem [shape: f32[8,72], index: 4, kind: input, shape index: {}]
  %s5 = inlined_call_operand.vmem [shape: f32[8,1], index: 5, kind: input, shape index: {}]
  %s6 = inlined_call_operand.vmem [shape: f32[8,72], index: 6, kind: input, shape index: {}]
  %s7 = inlined_call_operand.vmem [shape: f32[8,1], index: 7, kind: input, shape index: {}]
  %s8 = inlined_call_operand.vmem [shape: f32[2,8,384], index: 8, kind: output, shape index: {}]
  %s9 = sld [smem:[#allocation0]]
  $region65: #{cnn_layer_forward.1} parent=0
    _
  %s11 = ssub.s32 1, %s9
  %s12 = scalar_select 0, %s11, %s9
  loop: start=0, step=1, limit=4
  $region2: #{cnn_layer_forward.1} parent=0 // loop_pre_header
    _
  $region3: #{cnn_layer_forward.1} parent=0 // loop_header
    %s14 = sphi 0, %s18
    %p15 = scmp.ge.s32.totalorder %s14, 4
    %s24 = sphi 0, %s26
    %s27 = sphi 0, %s24
    %s28 = sphi 0, %s27
    %s44 = sphi 0, %s28
    %s48 = sphi 0, %s48
    %s50 = sphi 0, %s48
    %s51 = sphi 0, %s50
    %s65 = sphi 0, %s51
    %s69 = sphi 0, %s69
    %s71 = sphi 0, %s69
    %s72 = sphi 0, %s71
    %s86 = sphi 0, %s72
    %s90 = sphi 0, %s90
    %s92 = sphi 0, %s90
    %s93 = sphi 0, %s92
    %s107 = sphi 0, %s93
    %s111 = sphi 0, %s111
    %s113 = sphi 0, %s111
    %s114 = sphi 0, %s113
    %s128 = sphi 0, %s114
    %s132 = sphi 0, %s132
    %s134 = sphi 0, %s132
    %s135 = sphi 0, %s134
    %s149 = sphi 0, %s135
    %s153 = sphi 0, %s153
    %s155 = sphi 0, %s153
    %s156 = sphi 0, %s155
    %s170 = sphi 0, %s156
    %s174 = sphi 0, %s174
    %s176 = sphi 0, %s174
    %s177 = sphi 0, %s176
    %s191 = sphi 0, %s177
    %s197 = sphi 0, %s199
    %s200 = sphi 0, %s197
    %s201 = sphi 0, %s200
    %s217 = sphi 0, %s201
  $region4: #{cnn_layer_forward.1} parent=0 // loop_header_branch
    %17 = sbr.rel (%p15) target = $region8
  $region5: #{cnn_layer_forward.1} parent=0 // loop_body
    %s19 = ssub.s32 %s14, 1
    %s20 = ssub.s32 %s14, 2
    %s21 = sadd.s32 %s14, 1
    %s22 = ssub.s32 %s14, %s21
    %p23 = scmp.eq.s32.totalorder %s22, 0
    %s25 = sadd.s32 %s24, 1
    %s26 = scalar_select %p23, %s24, %s25
    %p29 = pneg %p23
    %p30 = scmp.eq.s32.totalorder %s14, 1
    %p31 = por %p29, %p30
    %p32 = scmp.ne.s32.totalorder %s24, %s27
    %p33 = scmp.eq.s32.totalorder %s14, 0
    %p34 = por %p32, %p33
    %p35 = scmp.ne.s32.totalorder %s24, %s27
    %p36 = scmp.eq.s32.totalorder %s19, 1
    %p37 = por %p35, %p36
    %p38 = scmp.ne.s32.totalorder %s27, %s28
    %p39 = scmp.eq.s32.totalorder %s19, 0
    %p40 = por %p38, %p39
    %p41 = scmp.ne.s32.totalorder %s27, %s28
    %p42 = scmp.eq.s32.totalorder %s20, 1
    %p43 = por %p41, %p42
    %p45 = scmp.ne.s32.totalorder %s28, %s44
    %p46 = scmp.eq.s32.totalorder %s20, 0
    %p47 = por %p45, %p46
    %s49 = sadd.s32 %s48, 1
    %p52 = scmp.eq.s32.totalorder %s14, 1
    %p53 = scmp.ne.s32.totalorder %s48, %s50
    %p54 = scmp.eq.s32.totalorder %s14, 0
    %p55 = por %p53, %p54
    %p56 = scmp.ne.s32.totalorder %s48, %s50
    %p57 = scmp.eq.s32.totalorder %s19, 1
    %p58 = por %p56, %p57
    %p59 = scmp.ne.s32.totalorder %s50, %s51
    %p60 = scmp.eq.s32.totalorder %s19, 0
    %p61 = por %p59, %p60
    %p62 = scmp.ne.s32.totalorder %s50, %s51
    %p63 = scmp.eq.s32.totalorder %s20, 1
    %p64 = por %p62, %p63
    %p66 = scmp.ne.s32.totalorder %s51, %s65
    %p67 = scmp.eq.s32.totalorder %s20, 0
    %p68 = por %p66, %p67
    %s70 = sadd.s32 %s69, 1
    %p73 = scmp.eq.s32.totalorder %s14, 1
    %p74 = scmp.ne.s32.totalorder %s69, %s71
    %p75 = scmp.eq.s32.totalorder %s14, 0
    %p76 = por %p74, %p75
    %p77 = scmp.ne.s32.totalorder %s69, %s71
    %p78 = scmp.eq.s32.totalorder %s19, 1
    %p79 = por %p77, %p78
    %p80 = scmp.ne.s32.totalorder %s71, %s72
    %p81 = scmp.eq.s32.totalorder %s19, 0
    %p82 = por %p80, %p81
    %p83 = scmp.ne.s32.totalorder %s71, %s72
    %p84 = scmp.eq.s32.totalorder %s20, 1
    %p85 = por %p83, %p84
    %p87 = scmp.ne.s32.totalorder %s72, %s86
    %p88 = scmp.eq.s32.totalorder %s20, 0
    %p89 = por %p87, %p88
    %s91 = sadd.s32 %s90, 1
    %p94 = scmp.eq.s32.totalorder %s14, 1
    %p95 = scmp.ne.s32.totalorder %s90, %s92
    %p96 = scmp.eq.s32.totalorder %s14, 0
    %p97 = por %p95, %p96
    %p98 = scmp.ne.s32.totalorder %s90, %s92
    %p99 = scmp.eq.s32.totalorder %s19, 1
    %p100 = por %p98, %p99
    %p101 = scmp.ne.s32.totalorder %s92, %s93
    %p102 = scmp.eq.s32.totalorder %s19, 0
    %p103 = por %p101, %p102
    %p104 = scmp.ne.s32.totalorder %s92, %s93
    %p105 = scmp.eq.s32.totalorder %s20, 1
    %p106 = por %p104, %p105
    %p108 = scmp.ne.s32.totalorder %s93, %s107
    %p109 = scmp.eq.s32.totalorder %s20, 0
    %p110 = por %p108, %p109
    %s112 = sadd.s32 %s111, 1
    %p115 = scmp.eq.s32.totalorder %s14, 1
    %p116 = scmp.ne.s32.totalorder %s111, %s113
    %p117 = scmp.eq.s32.totalorder %s14, 0
    %p118 = por %p116, %p117
    %p119 = scmp.ne.s32.totalorder %s111, %s113
    %p120 = scmp.eq.s32.totalorder %s19, 1
    %p121 = por %p119, %p120
    %p122 = scmp.ne.s32.totalorder %s113, %s114
    %p123 = scmp.eq.s32.totalorder %s19, 0
    %p124 = por %p122, %p123
    %p125 = scmp.ne.s32.totalorder %s113, %s114
    %p126 = scmp.eq.s32.totalorder %s20, 1
    %p127 = por %p125, %p126
    %p129 = scmp.ne.s32.totalorder %s114, %s128
    %p130 = scmp.eq.s32.totalorder %s20, 0
    %p131 = por %p129, %p130
    %s133 = sadd.s32 %s132, 1
    %p136 = scmp.eq.s32.totalorder %s14, 1
    %p137 = scmp.ne.s32.totalorder %s132, %s134
    %p138 = scmp.eq.s32.totalorder %s14, 0
    %p139 = por %p137, %p138
    %p140 = scmp.ne.s32.totalorder %s132, %s134
    %p141 = scmp.eq.s32.totalorder %s19, 1
    %p142 = por %p140, %p141
    %p143 = scmp.ne.s32.totalorder %s134, %s135
    %p144 = scmp.eq.s32.totalorder %s19, 0
    %p145 = por %p143, %p144
    %p146 = scmp.ne.s32.totalorder %s134, %s135
    %p147 = scmp.eq.s32.totalorder %s20, 1
    %p148 = por %p146, %p147
    %p150 = scmp.ne.s32.totalorder %s135, %s149
    %p151 = scmp.eq.s32.totalorder %s20, 0
    %p152 = por %p150, %p151
    %s154 = sadd.s32 %s153, 1
    %p157 = scmp.eq.s32.totalorder %s14, 1
    %p158 = scmp.ne.s32.totalorder %s153, %s155
    %p159 = scmp.eq.s32.totalorder %s14, 0
    %p160 = por %p158, %p159
    %p161 = scmp.ne.s32.totalorder %s153, %s155
    %p162 = scmp.eq.s32.totalorder %s19, 1
    %p163 = por %p161, %p162
    %p164 = scmp.ne.s32.totalorder %s155, %s156
    %p165 = scmp.eq.s32.totalorder %s19, 0
    %p166 = por %p164, %p165
    %p167 = scmp.ne.s32.totalorder %s155, %s156
    %p168 = scmp.eq.s32.totalorder %s20, 1
    %p169 = por %p167, %p168
    %p171 = scmp.ne.s32.totalorder %s156, %s170
    %p172 = scmp.eq.s32.totalorder %s20, 0
    %p173 = por %p171, %p172
    %s175 = sadd.s32 %s174, 1
    %p178 = scmp.eq.s32.totalorder %s14, 1
    %p179 = scmp.ne.s32.totalorder %s174, %s176
    %p180 = scmp.eq.s32.totalorder %s14, 0
    %p181 = por %p179, %p180
    %p182 = scmp.ne.s32.totalorder %s174, %s176
    %p183 = scmp.eq.s32.totalorder %s19, 1
    %p184 = por %p182, %p183
    %p185 = scmp.ne.s32.totalorder %s176, %s177
    %p186 = scmp.eq.s32.totalorder %s19, 0
    %p187 = por %p185, %p186
    %p188 = scmp.ne.s32.totalorder %s176, %s177
    %p189 = scmp.eq.s32.totalorder %s20, 1
    %p190 = por %p188, %p189
    %p192 = scmp.ne.s32.totalorder %s177, %s191
    %p193 = scmp.eq.s32.totalorder %s20, 0
    %p194 = por %p192, %p193
    %s195 = ssub.s32 %s14, %s21
    %p196 = scmp.eq.s32.totalorder %s195, 0
    %s198 = sadd.s32 %s197, 1
    %s199 = scalar_select %p196, %s197, %s198
    %p202 = pneg %p196
    %p203 = scmp.eq.s32.totalorder %s14, 1
    %p204 = por %p202, %p203
    %p205 = scmp.ne.s32.totalorder %s197, %s200
    %p206 = scmp.eq.s32.totalorder %s14, 0
    %p207 = por %p205, %p206
    %p208 = scmp.ne.s32.totalorder %s197, %s200
    %p209 = scmp.eq.s32.totalorder %s19, 1
    %p210 = por %p208, %p209
    %p211 = scmp.ne.s32.totalorder %s200, %s201
    %p212 = scmp.eq.s32.totalorder %s19, 0
    %p213 = por %p211, %p212
    %p214 = scmp.ne.s32.totalorder %s200, %s201
    %p215 = scmp.eq.s32.totalorder %s20, 1
    %p216 = por %p214, %p215
    %p218 = scmp.ne.s32.totalorder %s201, %s217
    %p219 = scmp.eq.s32.totalorder %s20, 0
    %p220 = por %p218, %p219
    %p221 = scmp.le.s32.totalorder 1, %s14
    %p222 = scmp.lt.s32.totalorder %s14, 3
    %p223 = pnand %p221, %p222
    %p224 = pneg %p223
    // Predicated region
    $region9: #{cnn_layer_forward.1} parent=5 // pred_check
      _
    $region10: #{cnn_layer_forward.1} parent=5 // pred_check_branch
      %226 = sbr.rel (%p223) target = $region12
    $region11: #{cnn_layer_forward.1} parent=5 // pred_region
      %s227 = ssub.s32 %s14, 1
      // Predicated region
      $region13: #{cnn_layer_forward.1} parent=11 // pred_check
        %p228 = pneg %p61
      $region14: #{cnn_layer_forward.1} parent=11 // pred_check_branch
        %230 = sbr.rel (%p228) target = $region16
      $region15: #{cnn_layer_forward.1} parent=11 // pred_region
        _
      $region16: #{cnn_layer_forward.1} parent=11 // pred_fallthru
        _
      // Predicated region
      $region17: #{cnn_layer_forward.1} parent=11 // pred_check
        %p231 = pneg %p82
      $region18: #{cnn_layer_forward.1} parent=11 // pred_check_branch
        %233 = sbr.rel (%p231) target = $region20
      $region19: #{cnn_layer_forward.1} parent=11 // pred_region
        _
      $region20: #{cnn_layer_forward.1} parent=11 // pred_fallthru
        _
      // Predicated region
      $region21: #{cnn_layer_forward.1} parent=11 // pred_check
        %p234 = pneg %p103
      $region22: #{cnn_layer_forward.1} parent=11 // pred_check_branch
        %236 = sbr.rel (%p234) target = $region24
      $region23: #{cnn_layer_forward.1} parent=11 // pred_region
        _
      $region24: #{cnn_layer_forward.1} parent=11 // pred_fallthru
        _
      // Predicated region
      $region25: #{cnn_layer_forward.1} parent=11 // pred_check
        %p237 = pneg %p124
      $region26: #{cnn_layer_forward.1} parent=11 // pred_check_branch
        %239 = sbr.rel (%p237) target = $region28
      $region27: #{cnn_layer_forward.1} parent=11 // pred_region
        _
      $region28: #{cnn_layer_forward.1} parent=11 // pred_fallthru
        _
      // Predicated region
      $region29: #{cnn_layer_forward.1} parent=11 // pred_check
        %p240 = pneg %p145
      $region30: #{cnn_layer_forward.1} parent=11 // pred_check_branch
        %242 = sbr.rel (%p240) target = $region32
      $region31: #{cnn_layer_forward.1} parent=11 // pred_region
        _
      $region32: #{cnn_layer_forward.1} parent=11 // pred_fallthru
        _
      // Predicated region
      $region33: #{cnn_layer_forward.1} parent=11 // pred_check
        %p243 = pneg %p166
      $region34: #{cnn_layer_forward.1} parent=11 // pred_check_branch
        %245 = sbr.rel (%p243) target = $region36
      $region35: #{cnn_layer_forward.1} parent=11 // pred_region
        _
      $region36: #{cnn_layer_forward.1} parent=11 // pred_fallthru
        _
      // Predicated region
      $region37: #{cnn_layer_forward.1} parent=11 // pred_check
        %p246 = pneg %p187
      $region38: #{cnn_layer_forward.1} parent=11 // pred_check_branch
        %248 = sbr.rel (%p246) target = $region40
      $region39: #{cnn_layer_forward.1} parent=11 // pred_region
        _
      $region40: #{cnn_layer_forward.1} parent=11 // pred_fallthru
        _
    $region12: #{cnn_layer_forward.1} parent=5 // pred_fallthru
      _
    %p249 = scmp.lt.s32.totalorder %s14, 2
    // Predicated region
    $region41: #{cnn_layer_forward.1} parent=5 // pred_check
      %p250 = pneg %p249
    $region42: #{cnn_layer_forward.1} parent=5 // pred_check_branch
      %252 = sbr.rel (%p250) target = $region44
    $region43: #{cnn_layer_forward.1} parent=5 // pred_region
      // Predicated region
      $region45: #{cnn_layer_forward.1} parent=43 // pred_check
        %p253 = pneg %p34
      $region46: #{cnn_layer_forward.1} parent=43 // pred_check_branch
        %255 = sbr.rel (%p253) target = $region48
      $region47: #{cnn_layer_forward.1} parent=43 // pred_region
        %p256 = scmp.lt.s32.totalorder %s14, 1
        %s257 = scalar_select %p256, %s14, 1
        %s258 = smul.addr %s257, 3
        %s259 = smul.addr %s258, 8
        %s260 = scalar_lea.vmem %s0, %s259
      $region48: #{cnn_layer_forward.1} parent=43 // pred_fallthru
        _
    $region44: #{cnn_layer_forward.1} parent=5 // pred_fallthru
      _
    %p261 = scmp.le.s32.totalorder 1, %s14
    %p262 = scmp.lt.s32.totalorder %s14, 3
    %p263 = pnand %p261, %p262
    %p264 = pneg %p263
    // Predicated region
    $region49: #{cnn_layer_forward.1} parent=5 // pred_check
      _
    $region50: #{cnn_layer_forward.1} parent=5 // pred_check_branch
      %266 = sbr.rel (%p263) target = $region52
    $region51: #{cnn_layer_forward.1} parent=5 // pred_region
      %s267 = ssub.s32 %s14, 1
      %p268 = scmp.lt.s32.totalorder %s19, 1
      %s269 = scalar_select %p268, %s19, 1
      %s270 = smul.addr %s269, 3
      %s271 = smul.addr %s270, 8
      %s272 = scalar_lea.vmem %s0, %s271
      %p273 = pneg %p40
      %p274 = pneg %p37
      %p275 = pneg %p61
      %p276 = pneg %p58
      %p277 = pneg %p82
      %p278 = pneg %p79
      %p279 = pneg %p103
      %p280 = pneg %p100
      %p281 = pneg %p124
      %p282 = pneg %p121
      %p283 = pneg %p145
      %p284 = pneg %p142
      %p285 = pneg %p166
      %p286 = pneg %p163
      %p287 = pneg %p187
      %p288 = pneg %p184
      %p289 = pneg %p213
      %p290 = pneg %p210
      %p291 = scmp.lt.s32.totalorder %s19, 1
      %s292 = scalar_select %p291, %s19, 1
      %s293 = smul.addr %s292, 3
      %s294 = smul.addr %s293, 8
      %s295 = scalar_lea.vmem %s8, %s294
      %p296 = scmp.lt.s32.totalorder %s19, 1
      %s297 = scalar_select %p296, %s19, 1
      %s298 = smul.addr %s297, 3
      %s299 = smul.addr %s298, 8
      %s300 = scalar_lea.vmem %s0, %s299
      %p301 = scmp.lt.s32.totalorder %s19, 1
      %s302 = scalar_select %p301, %s19, 1
      %s303 = smul.addr %s302, 3
      %s304 = smul.addr %s303, 8
      %s305 = scalar_lea.vmem %s8, %s304
      %v306 = vld [vmem:[%s1] sm:$0x7]
      %v307 = vld [vmem:[%s300] sm:$0xff]
      %v308 = vld [vmem:[%s300 + $0x8] sm:$0xff]
      %v309 = vld [vmem:[%s300 + $0x10] sm:$0xff]
      %v310 = vld [vmem:[%s2] sm:$0xff]
      %v311 = vld [vmem:[%s3] sm:$0xff]
      %312 = vrot.lane.b32.xlu0 %v307, 19
      %v313 = vpop.permute.xlu0 %312
      %314 = vrot.lane.b32.xlu0 %v308, 19
      %v315 = vpop.permute.xlu0 %314
      %316 = vrot.lane.b32.xlu0 %v309, 19
      %v317 = vpop.permute.xlu0 %316
      %v318 = vlaneseq
      %v319 = vand.u32 %v318, 127
      %vm320 = vcmp.lt.s32.totalorder %v319, 19
      %v321 = vsel %vm320, %v315, %v317
      %v322 = vsel %vm320, %v313, %v315
      %v323 = vsel %vm320, %v317, %v313
      %324 = vst [vmem:[#allocation2] sm:$0xff] %v323
      %325 = vst [vmem:[#allocation2 + $0x8] sm:$0xff] %v322
      %326 = vst [vmem:[#allocation2 + $0x10] sm:$0xff] %v321
      %327 = vrot.lane.b32.xlu0 %v307, 18
      %v328 = vpop.permute.xlu0 %327
      %329 = vrot.lane.b32.xlu0 %v308, 18
      %v330 = vpop.permute.xlu0 %329
      %331 = vrot.lane.b32.xlu0 %v309, 18
      %v332 = vpop.permute.xlu0 %331
      %vm333 = vcmp.lt.s32.totalorder %v319, 18
      %v334 = vsel %vm333, %v330, %v332
      %v335 = vsel %vm333, %v328, %v330
      %v336 = vsel %vm333, %v332, %v328
      %337 = vst [vmem:[#allocation2 + $0x18] sm:$0xff] %v336
      %338 = vst [vmem:[#allocation2 + $0x20] sm:$0xff] %v335
      %339 = vst [vmem:[#allocation2 + $0x28] sm:$0xff] %v334
      %340 = vrot.lane.b32.xlu0 %v307, 17
      %v341 = vpop.permute.xlu0 %340
      %342 = vrot.lane.b32.xlu0 %v308, 17
      %v343 = vpop.permute.xlu0 %342
      %344 = vrot.lane.b32.xlu0 %v309, 17
      %v345 = vpop.permute.xlu0 %344
      %vm346 = vcmp.lt.s32.totalorder %v319, 17
      %v347 = vsel %vm346, %v343, %v345
      %v348 = vsel %vm346, %v341, %v343
      %v349 = vsel %vm346, %v345, %v341
      %350 = vst [vmem:[#allocation2 + $0x30] sm:$0xff] %v349
      %351 = vst [vmem:[#allocation2 + $0x38] sm:$0xff] %v348
      %352 = vst [vmem:[#allocation2 + $0x40] sm:$0xff] %v347
      %353 = vrot.lane.b32.xlu0 %v307, 1
      %v354 = vpop.permute.xlu0 %353
      %355 = vrot.lane.b32.xlu0 %v308, 1
      %v356 = vpop.permute.xlu0 %355
      %357 = vrot.lane.b32.xlu0 %v309, 1
      %v358 = vpop.permute.xlu0 %357
      %vm359 = vcmp.lt.s32.totalorder %v319, 1
      %v360 = vsel %vm359, %v356, %v358
      %v361 = vsel %vm359, %v354, %v356
      %v362 = vsel %vm359, %v358, %v354
      %363 = vst [vmem:[#allocation2 + $0x48] sm:$0xff] %v362
      %364 = vst [vmem:[#allocation2 + $0x50] sm:$0xff] %v361
      %365 = vst [vmem:[#allocation2 + $0x58] sm:$0xff] %v360
      %366 = vst [vmem:[#allocation2 + $0x60] sm:$0xff] %v307
      %367 = vst [vmem:[#allocation2 + $0x68] sm:$0xff] %v308
      %368 = vst [vmem:[#allocation2 + $0x70] sm:$0xff] %v309
      %369 = vrot.lane.b32.xlu0 %v307, 127
      %v370 = vpop.permute.xlu0 %369
      %371 = vrot.lane.b32.xlu0 %v308, 127
      %v372 = vpop.permute.xlu0 %371
      %373 = vrot.lane.b32.xlu0 %v309, 127
      %v374 = vpop.permute.xlu0 %373
      %vm375 = vcmp.lt.s32.totalorder %v319, 127
      %v376 = vsel %vm375, %v372, %v374
      %v377 = vsel %vm375, %v370, %v372
      %v378 = vsel %vm375, %v374, %v370
      %379 = vst [vmem:[#allocation2 + $0x78] sm:$0xff] %v377
      %380 = vst [vmem:[#allocation2 + $0x80] sm:$0xff] %v376
      %381 = vst [vmem:[#allocation2 + $0x88] sm:$0xff] %v378
      %382 = vrot.lane.b32.xlu0 %v307, 111
      %v383 = vpop.permute.xlu0 %382
      %384 = vrot.lane.b32.xlu0 %v308, 111
      %v385 = vpop.permute.xlu0 %384
      %386 = vrot.lane.b32.xlu0 %v309, 111
      %v387 = vpop.permute.xlu0 %386
      %vm388 = vcmp.lt.s32.totalorder %v319, 111
      %v389 = vsel %vm388, %v385, %v387
      %v390 = vsel %vm388, %v383, %v385
      %v391 = vsel %vm388, %v387, %v383
      %392 = vst [vmem:[#allocation2 + $0x90] sm:$0xff] %v390
      %393 = vst [vmem:[#allocation2 + $0x98] sm:$0xff] %v389
      %394 = vst [vmem:[#allocation2 + $0xa0] sm:$0xff] %v391
      %395 = vrot.lane.b32.xlu0 %v307, 110
      %v396 = vpop.permute.xlu0 %395
      %397 = vrot.lane.b32.xlu0 %v308, 110
      %v398 = vpop.permute.xlu0 %397
      %399 = vrot.lane.b32.xlu0 %v309, 110
      %v400 = vpop.permute.xlu0 %399
      %vm401 = vcmp.lt.s32.totalorder %v319, 110
      %v402 = vsel %vm401, %v398, %v400
      %v403 = vsel %vm401, %v396, %v398
      %v404 = vsel %vm401, %v400, %v396
      %405 = vst [vmem:[#allocation2 + $0xa8] sm:$0xff] %v403
      %406 = vst [vmem:[#allocation2 + $0xb0] sm:$0xff] %v402
      %407 = vst [vmem:[#allocation2 + $0xb8] sm:$0xff] %v404
      %408 = vrot.lane.b32.xlu0 %v307, 109
      %v409 = vpop.permute.xlu0 %408
      %410 = vrot.lane.b32.xlu0 %v308, 109
      %v411 = vpop.permute.xlu0 %410
      %412 = vrot.lane.b32.xlu0 %v309, 109
      %v413 = vpop.permute.xlu0 %412
      %vm414 = vcmp.lt.s32.totalorder %v319, 109
      %v415 = vsel %vm414, %v411, %v413
      %v416 = vsel %vm414, %v409, %v411
      %v417 = vsel %vm414, %v413, %v409
      %418 = vst [vmem:[#allocation2 + $0xc0] sm:$0xff] %v416
      %419 = vst [vmem:[#allocation2 + $0xc8] sm:$0xff] %v415
      %420 = vst [vmem:[#allocation2 + $0xd0] sm:$0xff] %v417
      %v421 = vld [vmem:[#allocation2] sm:$0xff]
      %v422 = vld [vmem:[#allocation2 + $0x8] sm:$0xff]
      %v423 = vld [vmem:[#allocation2 + $0x10] sm:$0xff]
      %v424 = vld [vmem:[#allocation2 + $0x18] sm:$0xff]
      %v425 = vld [vmem:[#allocation2 + $0x20] sm:$0xff]
      %v426 = vld [vmem:[#allocation2 + $0x28] sm:$0xff]
      %v427 = vld [vmem:[#allocation2 + $0x30] sm:$0xff]
      %v428 = vld [vmem:[#allocation2 + $0x38] sm:$0xff]
      %v429 = vld [vmem:[#allocation2 + $0x40] sm:$0xff]
      %v430 = vld [vmem:[#allocation2 + $0x48] sm:$0xff]
      %v431 = vld [vmem:[#allocation2 + $0x50] sm:$0xff]
      %v432 = vld [vmem:[#allocation2 + $0x58] sm:$0xff]
      %v433 = vld [vmem:[#allocation2 + $0x60] sm:$0xff]
      %v434 = vld [vmem:[#allocation2 + $0x68] sm:$0xff]
      %v435 = vld [vmem:[#allocation2 + $0x70] sm:$0xff]
      %v436 = vld [vmem:[#allocation2 + $0x78] sm:$0xff]
      %v437 = vld [vmem:[#allocation2 + $0x80] sm:$0xff]
      %v438 = vld [vmem:[#allocation2 + $0x88] sm:$0xff]
      %v439 = vld [vmem:[#allocation2 + $0x90] sm:$0xff]
      %v440 = vld [vmem:[#allocation2 + $0x98] sm:$0xff]
      %v441 = vld [vmem:[#allocation2 + $0xa0] sm:$0xff]
      %v442 = vld [vmem:[#allocation2 + $0xa8] sm:$0xff]
      %v443 = vld [vmem:[#allocation2 + $0xb0] sm:$0xff]
      %v444 = vld [vmem:[#allocation2 + $0xb8] sm:$0xff]
      %v445 = vld [vmem:[#allocation2 + $0xc0] sm:$0xff]
      %v446 = vld [vmem:[#allocation2 + $0xc8] sm:$0xff]
      %v447 = vld [vmem:[#allocation2 + $0xd0] sm:$0xff]
      %449 = vset.pattern.permute.xlu0 0
      %450 = vperm.xlu0 %449, %v311
      %v451 = vpop.permute.xlu0 %450
      %vm453 = vcmask 588800
      %v455 = vsel %vm453, %v310, 0
      %457 = vmatprep.subr.mxu0 0.0
      %458 = vmatpush1.msra.mxu0 0.0
      %459 = vmatprep.subr.mxu0 0.0
      %460 = vmatpush1.msra.mxu0 0.0
      %461 = vmatprep.subr.mxu0 0.0
      %462 = vmatpush1.msra.mxu0 0.0
      %463 = vmatprep.subr.mxu0 0.0
      %464 = vmatpush1.msra.mxu0 0.0
      %465 = vmatprep.subr.mxu0 0.0
      %466 = vmatpush1.msra.mxu0 0.0
      %467 = vmatprep.subr.mxu0 0.0
      %468 = vmatpush1.msra.mxu0 0.0
      %469 = vmatprep.subr.mxu0 0.0
      %470 = vmatpush1.msra.mxu0 0.0
      %471 = vmatprep.subr.mxu0 %v446
      %472 = vmatpush1.msra.mxu0 %v445
      %473 = vmatprep.subr.mxu0 %v443
      %474 = vmatpush1.msra.mxu0 %v442
      %475 = vmatprep.subr.mxu0 %v440
      %476 = vmatpush1.msra.mxu0 %v439
      %477 = vmatprep.subr.mxu0 %v437
      %478 = vmatpush1.msra.mxu0 %v436
      %479 = vmatprep.subr.mxu0 %v434
      %480 = vmatpush1.msra.mxu0 %v433
      %481 = vmatprep.subr.mxu0 %v431
      %482 = vmatpush1.msra.mxu0 %v430
      %483 = vmatprep.subr.mxu0 %v428
      %484 = vmatpush1.msra.mxu0 %v427
      %485 = vmatprep.subr.mxu0 %v425
      %486 = vmatpush1.msra.mxu0 %v424
      %487 = vmatprep.subr.mxu0 %v422
      %488 = vmatpush1.msra.mxu0 %v421
      %489 = vmatprep.subr.mxu0 0.0
      %490 = vmatpush2.msra.mxu0 0.0
      %491 = vmatprep.subr.mxu0 0.0
      %492 = vmatpush2.msra.mxu0 0.0
      %493 = vmatprep.subr.mxu0 0.0
      %494 = vmatpush2.msra.mxu0 0.0
      %495 = vmatprep.subr.mxu0 0.0
      %496 = vmatpush2.msra.mxu0 0.0
      %497 = vmatprep.subr.mxu0 0.0
      %498 = vmatpush2.msra.mxu0 0.0
      %499 = vmatprep.subr.mxu0 0.0
      %500 = vmatpush2.msra.mxu0 0.0
      %501 = vmatprep.subr.mxu0 0.0
      %502 = vmatpush2.msra.mxu0 0.0
      %503 = vmatprep.subr.mxu0 0.0
      %504 = vmatpush2.msra.mxu0 0.0
      %505 = vmatprep.subr.mxu0 0.0
      %506 = vmatpush2.msra.mxu0 0.0
      %507 = vmatprep.subr.mxu0 0.0
      %508 = vmatpush2.msra.mxu0 0.0
      %509 = vmatprep.subr.mxu0 0.0
      %510 = vmatpush2.msra.mxu0 0.0
      %511 = vmatprep.subr.mxu0 0.0
      %512 = vmatpush2.msra.mxu0 0.0
      %513 = vmatprep.subr.mxu0 0.0
      %514 = vmatpush2.msra.mxu0 0.0
      %515 = vmatprep.subr.mxu0 0.0
      %516 = vmatpush2.msra.mxu0 0.0
      %517 = vmatprep.subr.mxu0 0.0
      %518 = vmatpush2.msra.mxu0 0.0
      %519 = vmatprep.subr.mxu0 0.0
      %520 = vmatpush2.msra.mxu0 0.0
      %521 = vmatprep.mubr.f32.mxu0 0.0
      %522 = vmatmul.mubr.f32.gmra.mxu0 %v455
      %v523 = vpop.f32.mrf.mxu0
      %v524 = vadd.f32 %v451, %v523
      %v525 = vpop.f32.mrf.mxu0
      %v526 = vadd.f32 %v451, %v525
      %527 = vdwg.mxu0
      %528 = vmatprep.subr.mxu0 0.0
      %529 = vmatpush1.msra.mxu0 0.0
      %530 = vmatprep.subr.mxu0 0.0
      %531 = vmatpush1.msra.mxu0 0.0
      %532 = vmatprep.subr.mxu0 0.0
      %533 = vmatpush1.msra.mxu0 0.0
      %534 = vmatprep.subr.mxu0 0.0
      %535 = vmatpush1.msra.mxu0 0.0
      %536 = vmatprep.subr.mxu0 0.0
      %537 = vmatpush1.msra.mxu0 0.0
      %538 = vmatprep.subr.mxu0 0.0
      %539 = vmatpush1.msra.mxu0 0.0
      %540 = vmatprep.subr.mxu0 0.0
      %541 = vmatpush1.msra.mxu0 0.0
      %542 = vmatprep.subr.mxu0 0.0
      %543 = vmatpush1.msra.mxu0 %v447
      %544 = vmatprep.subr.mxu0 0.0
      %545 = vmatpush1.msra.mxu0 %v444
      %546 = vmatprep.subr.mxu0 0.0
      %547 = vmatpush1.msra.mxu0 %v441
      %548 = vmatprep.subr.mxu0 0.0
      %549 = vmatpush1.msra.mxu0 %v438
      %550 = vmatprep.subr.mxu0 0.0
      %551 = vmatpush1.msra.mxu0 %v435
      %552 = vmatprep.subr.mxu0 0.0
      %553 = vmatpush1.msra.mxu0 %v432
      %554 = vmatprep.subr.mxu0 0.0
      %555 = vmatpush1.msra.mxu0 %v429
      %556 = vmatprep.subr.mxu0 0.0
      %557 = vmatpush1.msra.mxu0 %v426
      %558 = vmatprep.subr.mxu0 0.0
      %559 = vmatpush1.msra.mxu0 %v423
      %560 = vmatprep.subr.mxu0 0.0
      %561 = vmatpush2.msra.mxu0 0.0
      %562 = vmatprep.subr.mxu0 0.0
      %563 = vmatpush2.msra.mxu0 0.0
      %564 = vmatprep.subr.mxu0 0.0
      %565 = vmatpush2.msra.mxu0 0.0
      %566 = vmatprep.subr.mxu0 0.0
      %567 = vmatpush2.msra.mxu0 0.0
      %568 = vmatprep.subr.mxu0 0.0
      %569 = vmatpush2.msra.mxu0 0.0
      %570 = vmatprep.subr.mxu0 0.0
      %571 = vmatpush2.msra.mxu0 0.0
      %572 = vmatprep.subr.mxu0 0.0
      %573 = vmatpush2.msra.mxu0 0.0
      %574 = vmatprep.subr.mxu0 0.0
      %575 = vmatpush2.msra.mxu0 0.0
      %576 = vmatprep.subr.mxu0 0.0
      %577 = vmatpush2.msra.mxu0 0.0
      %578 = vmatprep.subr.mxu0 0.0
      %579 = vmatpush2.msra.mxu0 0.0
      %580 = vmatprep.subr.mxu0 0.0
      %581 = vmatpush2.msra.mxu0 0.0
      %582 = vmatprep.subr.mxu0 0.0
      %583 = vmatpush2.msra.mxu0 0.0
      %584 = vmatprep.subr.mxu0 0.0
      %585 = vmatpush2.msra.mxu0 0.0
      %586 = vmatprep.subr.mxu0 0.0
      %587 = vmatpush2.msra.mxu0 0.0
      %588 = vmatprep.subr.mxu0 0.0
      %589 = vmatpush2.msra.mxu0 0.0
      %590 = vmatprep.subr.mxu0 0.0
      %591 = vmatpush2.msra.mxu0 0.0
      %592 = vmatprep.mubr.f32.mxu0 0.0
      %593 = vmatmul.mubr.f32.gmra.mxu0 %v455
      %v594 = vpop.f32.mrf.mxu0
      %v595 = vadd.f32 %v451, %v594
      %v596 = vpop.f32.mrf.mxu0
      %597 = vdwg.mxu0
      %vm598 = vcmp.ge.f32.partialorder %v524, 0.0
      %vm599 = vcmp.ge.f32.partialorder %v526, 0.0
      %vm600 = vcmp.ge.f32.partialorder %v595, 0.0
      %v601 = vmul.f32 %v524, 0.01
      %v602 = vmul.f32 %v526, 0.01
      %v603 = vmul.f32 %v595, 0.01
      %v604 = vsel %vm598, %v524, %v601
      %v605 = vsel %vm599, %v526, %v602
      %v606 = vsel %vm600, %v595, %v603
      %v608 = vlaneseq
      %v609 = vshrl.u32 %v608, 7
      %v610 = vsub.s32 0, %v609
      %v611 = vrot.slane %v306, %v610
      %v612 = vlaneseq
      %v613 = vshrl.u32 %v612, 7
      %v614 = vsub.s32 1, %v613
      %v615 = vrot.slane %v306, %v614
      %v616 = vlaneseq
      %v617 = vshrl.u32 %v616, 7
      %v618 = vsub.s32 2, %v617
      %v619 = vrot.slane %v306, %v618
      %v623 = vmul.f32 %v604, %v611
      %v624 = vmul.f32 %v605, %v615
      %v625 = vmul.f32 %v606, %v619
      %v626 = vld [vmem:[%s4] sm:$0xff]
      %v627 = vld [vmem:[%s5] sm:$0xff]
      %628 = vrot.lane.b32.xlu0 %v623, 19
      %v629 = vpop.permute.xlu0 %628
      %630 = vrot.lane.b32.xlu0 %v624, 19
      %v631 = vpop.permute.xlu0 %630
      %632 = vrot.lane.b32.xlu0 %v625, 19
      %v633 = vpop.permute.xlu0 %632
      %v634 = vsel %vm320, %v631, %v633
      %v635 = vsel %vm320, %v629, %v631
      %v636 = vsel %vm320, %v633, %v629
      %637 = vst [vmem:[#allocation2] sm:$0xff] %v636
      %638 = vst [vmem:[#allocation2 + $0x8] sm:$0xff] %v635
      %639 = vst [vmem:[#allocation2 + $0x10] sm:$0xff] %v634
      %640 = vrot.lane.b32.xlu0 %v623, 18
      %v641 = vpop.permute.xlu0 %640
      %642 = vrot.lane.b32.xlu0 %v624, 18
      %v643 = vpop.permute.xlu0 %642
      %644 = vrot.lane.b32.xlu0 %v625, 18
      %v645 = vpop.permute.xlu0 %644
      %v646 = vsel %vm333, %v643, %v645
      %v647 = vsel %vm333, %v641, %v643
      %v648 = vsel %vm333, %v645, %v641
      %649 = vst [vmem:[#allocation2 + $0x18] sm:$0xff] %v648
      %650 = vst [vmem:[#allocation2 + $0x20] sm:$0xff] %v647
      %651 = vst [vmem:[#allocation2 + $0x28] sm:$0xff] %v646
      %652 = vrot.lane.b32.xlu0 %v623, 17
      %v653 = vpop.permute.xlu0 %652
      %654 = vrot.lane.b32.xlu0 %v624, 17
      %v655 = vpop.permute.xlu0 %654
      %656 = vrot.lane.b32.xlu0 %v625, 17
      %v657 = vpop.permute.xlu0 %656
      %v658 = vsel %vm346, %v655, %v657
      %v659 = vsel %vm346, %v653, %v655
      %v660 = vsel %vm346, %v657, %v653
      %661 = vst [vmem:[#allocation2 + $0x30] sm:$0xff] %v660
      %662 = vst [vmem:[#allocation2 + $0x38] sm:$0xff] %v659
      %663 = vst [vmem:[#allocation2 + $0x40] sm:$0xff] %v658
      %664 = vrot.lane.b32.xlu0 %v623, 1
      %v665 = vpop.permute.xlu0 %664
      %666 = vrot.lane.b32.xlu0 %v624, 1
      %v667 = vpop.permute.xlu0 %666
      %668 = vrot.lane.b32.xlu0 %v625, 1
      %v669 = vpop.permute.xlu0 %668
      %v670 = vsel %vm359, %v667, %v669
      %v671 = vsel %vm359, %v665, %v667
      %v672 = vsel %vm359, %v669, %v665
      %673 = vst [vmem:[#allocation2 + $0x48] sm:$0xff] %v672
      %674 = vst [vmem:[#allocation2 + $0x50] sm:$0xff] %v671
      %675 = vst [vmem:[#allocation2 + $0x58] sm:$0xff] %v670
      %676 = vst [vmem:[#allocation2 + $0x60] sm:$0xff] %v623
      %677 = vst [vmem:[#allocation2 + $0x68] sm:$0xff] %v624
      %678 = vst [vmem:[#allocation2 + $0x70] sm:$0xff] %v625
      %679 = vrot.lane.b32.xlu0 %v623, 127
      %v680 = vpop.permute.xlu0 %679
      %681 = vrot.lane.b32.xlu0 %v624, 127
      %v682 = vpop.permute.xlu0 %681
      %683 = vrot.lane.b32.xlu0 %v625, 127
      %v684 = vpop.permute.xlu0 %683
      %v685 = vsel %vm375, %v682, %v684
      %v686 = vsel %vm375, %v680, %v682
      %v687 = vsel %vm375, %v684, %v680
      %688 = vst [vmem:[#allocation2 + $0x78] sm:$0xff] %v686
      %689 = vst [vmem:[#allocation2 + $0x80] sm:$0xff] %v685
      %690 = vst [vmem:[#allocation2 + $0x88] sm:$0xff] %v687
      %691 = vrot.lane.b32.xlu0 %v623, 111
      %v692 = vpop.permute.xlu0 %691
      %693 = vrot.lane.b32.xlu0 %v624, 111
      %v694 = vpop.permute.xlu0 %693
      %695 = vrot.lane.b32.xlu0 %v625, 111
      %v696 = vpop.permute.xlu0 %695
      %v697 = vsel %vm388, %v694, %v696
      %v698 = vsel %vm388, %v692, %v694
      %v699 = vsel %vm388, %v696, %v692
      %700 = vst [vmem:[#allocation2 + $0x90] sm:$0xff] %v698
      %701 = vst [vmem:[#allocation2 + $0x98] sm:$0xff] %v697
      %702 = vst [vmem:[#allocation2 + $0xa0] sm:$0xff] %v699
      %703 = vrot.lane.b32.xlu0 %v623, 110
      %v704 = vpop.permute.xlu0 %703
      %705 = vrot.lane.b32.xlu0 %v624, 110
      %v706 = vpop.permute.xlu0 %705
      %707 = vrot.lane.b32.xlu0 %v625, 110
      %v708 = vpop.permute.xlu0 %707
      %v709 = vsel %vm401, %v706, %v708
      %v710 = vsel %vm401, %v704, %v706
      %v711 = vsel %vm401, %v708, %v704
      %712 = vst [vmem:[#allocation2 + $0xa8] sm:$0xff] %v710
      %713 = vst [vmem:[#allocation2 + $0xb0] sm:$0xff] %v709
      %714 = vst [vmem:[#allocation2 + $0xb8] sm:$0xff] %v711
      %715 = vrot.lane.b32.xlu0 %v623, 109
      %v716 = vpop.permute.xlu0 %715
      %717 = vrot.lane.b32.xlu0 %v624, 109
      %v718 = vpop.permute.xlu0 %717
      %719 = vrot.lane.b32.xlu0 %v625, 109
      %v720 = vpop.permute.xlu0 %719
      %v721 = vsel %vm414, %v718, %v720
      %v722 = vsel %vm414, %v716, %v718
      %v723 = vsel %vm414, %v720, %v716
      %724 = vst [vmem:[#allocation2 + $0xc0] sm:$0xff] %v722
      %725 = vst [vmem:[#allocation2 + $0xc8] sm:$0xff] %v721
      %726 = vst [vmem:[#allocation2 + $0xd0] sm:$0xff] %v723
      %v727 = vld [vmem:[#allocation2] sm:$0xff]
      %v728 = vld [vmem:[#allocation2 + $0x8] sm:$0xff]
      %v729 = vld [vmem:[#allocation2 + $0x10] sm:$0xff]
      %v730 = vld [vmem:[#allocation2 + $0x18] sm:$0xff]
      %v731 = vld [vmem:[#allocation2 + $0x20] sm:$0xff]
      %v732 = vld [vmem:[#allocation2 + $0x28] sm:$0xff]
      %v733 = vld [vmem:[#allocation2 + $0x30] sm:$0xff]
      %v734 = vld [vmem:[#allocation2 + $0x38] sm:$0xff]
      %v735 = vld [vmem:[#allocation2 + $0x40] sm:$0xff]
      %v736 = vld [vmem:[#allocation2 + $0x48] sm:$0xff]
      %v737 = vld [vmem:[#allocation2 + $0x50] sm:$0xff]
      %v738 = vld [vmem:[#allocation2 + $0x58] sm:$0xff]
      %v739 = vld [vmem:[#allocation2 + $0x60] sm:$0xff]
      %v740 = vld [vmem:[#allocation2 + $0x68] sm:$0xff]
      %v741 = vld [vmem:[#allocation2 + $0x70] sm:$0xff]
      %v742 = vld [vmem:[#allocation2 + $0x78] sm:$0xff]
      %v743 = vld [vmem:[#allocation2 + $0x80] sm:$0xff]
      %v744 = vld [vmem:[#allocation2 + $0x88] sm:$0xff]
      %v745 = vld [vmem:[#allocation2 + $0x90] sm:$0xff]
      %v746 = vld [vmem:[#allocation2 + $0x98] sm:$0xff]
      %v747 = vld [vmem:[#allocation2 + $0xa0] sm:$0xff]
      %v748 = vld [vmem:[#allocation2 + $0xa8] sm:$0xff]
      %v749 = vld [vmem:[#allocation2 + $0xb0] sm:$0xff]
      %v750 = vld [vmem:[#allocation2 + $0xb8] sm:$0xff]
      %v751 = vld [vmem:[#allocation2 + $0xc0] sm:$0xff]
      %v752 = vld [vmem:[#allocation2 + $0xc8] sm:$0xff]
      %v753 = vld [vmem:[#allocation2 + $0xd0] sm:$0xff]
      %755 = vset.pattern.permute.xlu0 0
      %756 = vperm.xlu0 %755, %v627
      %v757 = vpop.permute.xlu0 %756
      %v760 = vsel %vm453, %v626, 0
      %762 = vmatprep.subr.mxu0 0.0
      %763 = vmatpush1.msra.mxu0 0.0
      %764 = vmatprep.subr.mxu0 0.0
      %765 = vmatpush1.msra.mxu0 0.0
      %766 = vmatprep.subr.mxu0 0.0
      %767 = vmatpush1.msra.mxu0 0.0
      %768 = vmatprep.subr.mxu0 0.0
      %769 = vmatpush1.msra.mxu0 0.0
      %770 = vmatprep.subr.mxu0 0.0
      %771 = vmatpush1.msra.mxu0 0.0
      %772 = vmatprep.subr.mxu0 0.0
      %773 = vmatpush1.msra.mxu0 0.0
      %774 = vmatprep.subr.mxu0 0.0
      %775 = vmatpush1.msra.mxu0 0.0
      %776 = vmatprep.subr.mxu0 %v752
      %777 = vmatpush1.msra.mxu0 %v751
      %778 = vmatprep.subr.mxu0 %v749
      %779 = vmatpush1.msra.mxu0 %v748
      %780 = vmatprep.subr.mxu0 %v746
      %781 = vmatpush1.msra.mxu0 %v745
      %782 = vmatprep.subr.mxu0 %v743
      %783 = vmatpush1.msra.mxu0 %v742
      %784 = vmatprep.subr.mxu0 %v740
      %785 = vmatpush1.msra.mxu0 %v739
      %786 = vmatprep.subr.mxu0 %v737
      %787 = vmatpush1.msra.mxu0 %v736
      %788 = vmatprep.subr.mxu0 %v734
      %789 = vmatpush1.msra.mxu0 %v733
      %790 = vmatprep.subr.mxu0 %v731
      %791 = vmatpush1.msra.mxu0 %v730
      %792 = vmatprep.subr.mxu0 %v728
      %793 = vmatpush1.msra.mxu0 %v727
      %794 = vmatprep.subr.mxu0 0.0
      %795 = vmatpush2.msra.mxu0 0.0
      %796 = vmatprep.subr.mxu0 0.0
      %797 = vmatpush2.msra.mxu0 0.0
      %798 = vmatprep.subr.mxu0 0.0
      %799 = vmatpush2.msra.mxu0 0.0
      %800 = vmatprep.subr.mxu0 0.0
      %801 = vmatpush2.msra.mxu0 0.0
      %802 = vmatprep.subr.mxu0 0.0
      %803 = vmatpush2.msra.mxu0 0.0
      %804 = vmatprep.subr.mxu0 0.0
      %805 = vmatpush2.msra.mxu0 0.0
      %806 = vmatprep.subr.mxu0 0.0
      %807 = vmatpush2.msra.mxu0 0.0
      %808 = vmatprep.subr.mxu0 0.0
      %809 = vmatpush2.msra.mxu0 0.0
      %810 = vmatprep.subr.mxu0 0.0
      %811 = vmatpush2.msra.mxu0 0.0
      %812 = vmatprep.subr.mxu0 0.0
      %813 = vmatpush2.msra.mxu0 0.0
      %814 = vmatprep.subr.mxu0 0.0
      %815 = vmatpush2.msra.mxu0 0.0
      %816 = vmatprep.subr.mxu0 0.0
      %817 = vmatpush2.msra.mxu0 0.0
      %818 = vmatprep.subr.mxu0 0.0
      %819 = vmatpush2.msra.mxu0 0.0
      %820 = vmatprep.subr.mxu0 0.0
      %821 = vmatpush2.msra.mxu0 0.0
      %822 = vmatprep.subr.mxu0 0.0
      %823 = vmatpush2.msra.mxu0 0.0
      %824 = vmatprep.subr.mxu0 0.0
      %825 = vmatpush2.msra.mxu0 0.0
      %826 = vmatprep.mubr.f32.mxu0 0.0
      %827 = vmatmul.mubr.f32.gmra.mxu0 %v760
      %v828 = vpop.f32.mrf.mxu0
      %v829 = vadd.f32 %v757, %v828
      %v830 = vpop.f32.mrf.mxu0
      %v831 = vadd.f32 %v757, %v830
      %832 = vdwg.mxu0
      %833 = vmatprep.subr.mxu0 0.0
      %834 = vmatpush1.msra.mxu0 0.0
      %835 = vmatprep.subr.mxu0 0.0
      %836 = vmatpush1.msra.mxu0 0.0
      %837 = vmatprep.subr.mxu0 0.0
      %838 = vmatpush1.msra.mxu0 0.0
      %839 = vmatprep.subr.mxu0 0.0
      %840 = vmatpush1.msra.mxu0 0.0
      %841 = vmatprep.subr.mxu0 0.0
      %842 = vmatpush1.msra.mxu0 0.0
      %843 = vmatprep.subr.mxu0 0.0
      %844 = vmatpush1.msra.mxu0 0.0
      %845 = vmatprep.subr.mxu0 0.0
      %846 = vmatpush1.msra.mxu0 0.0
      %847 = vmatprep.subr.mxu0 0.0
      %848 = vmatpush1.msra.mxu0 %v753
      %849 = vmatprep.subr.mxu0 0.0
      %850 = vmatpush1.msra.mxu0 %v750
      %851 = vmatprep.subr.mxu0 0.0
      %852 = vmatpush1.msra.mxu0 %v747
      %853 = vmatprep.subr.mxu0 0.0
      %854 = vmatpush1.msra.mxu0 %v744
      %855 = vmatprep.subr.mxu0 0.0
      %856 = vmatpush1.msra.mxu0 %v741
      %857 = vmatprep.subr.mxu0 0.0
      %858 = vmatpush1.msra.mxu0 %v738
      %859 = vmatprep.subr.mxu0 0.0
      %860 = vmatpush1.msra.mxu0 %v735
      %861 = vmatprep.subr.mxu0 0.0
      %862 = vmatpush1.msra.mxu0 %v732
      %863 = vmatprep.subr.mxu0 0.0
      %864 = vmatpush1.msra.mxu0 %v729
      %865 = vmatprep.subr.mxu0 0.0
      %866 = vmatpush2.msra.mxu0 0.0
      %867 = vmatprep.subr.mxu0 0.0
      %868 = vmatpush2.msra.mxu0 0.0
      %869 = vmatprep.subr.mxu0 0.0
      %870 = vmatpush2.msra.mxu0 0.0
      %871 = vmatprep.subr.mxu0 0.0
      %872 = vmatpush2.msra.mxu0 0.0
      %873 = vmatprep.subr.mxu0 0.0
      %874 = vmatpush2.msra.mxu0 0.0
      %875 = vmatprep.subr.mxu0 0.0
      %876 = vmatpush2.msra.mxu0 0.0
      %877 = vmatprep.subr.mxu0 0.0
      %878 = vmatpush2.msra.mxu0 0.0
      %879 = vmatprep.subr.mxu0 0.0
      %880 = vmatpush2.msra.mxu0 0.0
      %881 = vmatprep.subr.mxu0 0.0
      %882 = vmatpush2.msra.mxu0 0.0
      %883 = vmatprep.subr.mxu0 0.0
      %884 = vmatpush2.msra.mxu0 0.0
      %885 = vmatprep.subr.mxu0 0.0
      %886 = vmatpush2.msra.mxu0 0.0
      %887 = vmatprep.subr.mxu0 0.0
      %888 = vmatpush2.msra.mxu0 0.0
      %889 = vmatprep.subr.mxu0 0.0
      %890 = vmatpush2.msra.mxu0 0.0
      %891 = vmatprep.subr.mxu0 0.0
      %892 = vmatpush2.msra.mxu0 0.0
      %893 = vmatprep.subr.mxu0 0.0
      %894 = vmatpush2.msra.mxu0 0.0
      %895 = vmatprep.subr.mxu0 0.0
      %896 = vmatpush2.msra.mxu0 0.0
      %897 = vmatprep.mubr.f32.mxu0 0.0
      %898 = vmatmul.mubr.f32.gmra.mxu0 %v760
      %v899 = vpop.f32.mrf.mxu0
      %v900 = vadd.f32 %v757, %v899
      %v901 = vpop.f32.mrf.mxu0
      %902 = vdwg.mxu0
      %vm903 = vcmp.ge.f32.partialorder %v829, 0.0
      %vm904 = vcmp.ge.f32.partialorder %v831, 0.0
      %vm905 = vcmp.ge.f32.partialorder %v900, 0.0
      %v906 = vmul.f32 %v829, 0.01
      %v907 = vmul.f32 %v831, 0.01
      %v908 = vmul.f32 %v900, 0.01
      %v909 = vsel %vm903, %v829, %v906
      %v910 = vsel %vm904, %v831, %v907
      %v911 = vsel %vm905, %v900, %v908
      %v912 = vmul.f32 %v909, %v611
      %v913 = vmul.f32 %v910, %v615
      %v914 = vmul.f32 %v911, %v619
      %v915 = vld [vmem:[%s6] sm:$0xff]
      %v916 = vld [vmem:[%s7] sm:$0xff]
      %917 = vrot.lane.b32.xlu0 %v912, 19
      %v918 = vpop.permute.xlu0 %917
      %919 = vrot.lane.b32.xlu0 %v913, 19
      %v920 = vpop.permute.xlu0 %919
      %921 = vrot.lane.b32.xlu0 %v914, 19
      %v922 = vpop.permute.xlu0 %921
      %v923 = vsel %vm320, %v920, %v922
      %v924 = vsel %vm320, %v918, %v920
      %v925 = vsel %vm320, %v922, %v918
      %926 = vst [vmem:[#allocation2] sm:$0xff] %v925
      %927 = vst [vmem:[#allocation2 + $0x8] sm:$0xff] %v924
      %928 = vst [vmem:[#allocation2 + $0x10] sm:$0xff] %v923
      %929 = vrot.lane.b32.xlu0 %v912, 18
      %v930 = vpop.permute.xlu0 %929
      %931 = vrot.lane.b32.xlu0 %v913, 18
      %v932 = vpop.permute.xlu0 %931
      %933 = vrot.lane.b32.xlu0 %v914, 18
      %v934 = vpop.permute.xlu0 %933
      %v935 = vsel %vm333, %v932, %v934
      %v936 = vsel %vm333, %v930, %v932
      %v937 = vsel %vm333, %v934, %v930
      %938 = vst [vmem:[#allocation2 + $0x18] sm:$0xff] %v937
      %939 = vst [vmem:[#allocation2 + $0x20] sm:$0xff] %v936
      %940 = vst [vmem:[#allocation2 + $0x28] sm:$0xff] %v935
      %941 = vrot.lane.b32.xlu0 %v912, 17
      %v942 = vpop.permute.xlu0 %941
      %943 = vrot.lane.b32.xlu0 %v913, 17
      %v944 = vpop.permute.xlu0 %943
      %945 = vrot.lane.b32.xlu0 %v914, 17
      %v946 = vpop.permute.xlu0 %945
      %v947 = vsel %vm346, %v944, %v946
      %v948 = vsel %vm346, %v942, %v944
      %v949 = vsel %vm346, %v946, %v942
      %950 = vst [vmem:[#allocation2 + $0x30] sm:$0xff] %v949
      %951 = vst [vmem:[#allocation2 + $0x38] sm:$0xff] %v948
      %952 = vst [vmem:[#allocation2 + $0x40] sm:$0xff] %v947
      %953 = vrot.lane.b32.xlu0 %v912, 1
      %v954 = vpop.permute.xlu0 %953
      %955 = vrot.lane.b32.xlu0 %v913, 1
      %v956 = vpop.permute.xlu0 %955
      %957 = vrot.lane.b32.xlu0 %v914, 1
      %v958 = vpop.permute.xlu0 %957
      %v959 = vsel %vm359, %v956, %v958
      %v960 = vsel %vm359, %v954, %v956
      %v961 = vsel %vm359, %v958, %v954
      %962 = vst [vmem:[#allocation2 + $0x48] sm:$0xff] %v961
      %963 = vst [vmem:[#allocation2 + $0x50] sm:$0xff] %v960
      %964 = vst [vmem:[#allocation2 + $0x58] sm:$0xff] %v959
      %965 = vst [vmem:[#allocation2 + $0x60] sm:$0xff] %v912
      %966 = vst [vmem:[#allocation2 + $0x68] sm:$0xff] %v913
      %967 = vst [vmem:[#allocation2 + $0x70] sm:$0xff] %v914
      %968 = vrot.lane.b32.xlu0 %v912, 127
      %v969 = vpop.permute.xlu0 %968
      %970 = vrot.lane.b32.xlu0 %v913, 127
      %v971 = vpop.permute.xlu0 %970
      %972 = vrot.lane.b32.xlu0 %v914, 127
      %v973 = vpop.permute.xlu0 %972
      %v974 = vsel %vm375, %v971, %v973
      %v975 = vsel %vm375, %v969, %v971
      %v976 = vsel %vm375, %v973, %v969
      %977 = vst [vmem:[#allocation2 + $0x78] sm:$0xff] %v975
      %978 = vst [vmem:[#allocation2 + $0x80] sm:$0xff] %v974
      %979 = vst [vmem:[#allocation2 + $0x88] sm:$0xff] %v976
      %980 = vrot.lane.b32.xlu0 %v912, 111
      %v981 = vpop.permute.xlu0 %980
      %982 = vrot.lane.b32.xlu0 %v913, 111
      %v983 = vpop.permute.xlu0 %982
      %984 = vrot.lane.b32.xlu0 %v914, 111
      %v985 = vpop.permute.xlu0 %984
      %v986 = vsel %vm388, %v983, %v985
      %v987 = vsel %vm388, %v981, %v983
      %v988 = vsel %vm388, %v985, %v981
      %989 = vst [vmem:[#allocation2 + $0x90] sm:$0xff] %v987
      %990 = vst [vmem:[#allocation2 + $0x98] sm:$0xff] %v986
      %991 = vst [vmem:[#allocation2 + $0xa0] sm:$0xff] %v988
      %992 = vrot.lane.b32.xlu0 %v912, 110
      %v993 = vpop.permute.xlu0 %992
      %994 = vrot.lane.b32.xlu0 %v913, 110
      %v995 = vpop.permute.xlu0 %994
      %996 = vrot.lane.b32.xlu0 %v914, 110
      %v997 = vpop.permute.xlu0 %996
      %v998 = vsel %vm401, %v995, %v997
      %v999 = vsel %vm401, %v993, %v995
      %v1000 = vsel %vm401, %v997, %v993
      %1001 = vst [vmem:[#allocation2 + $0xa8] sm:$0xff] %v999
      %1002 = vst [vmem:[#allocation2 + $0xb0] sm:$0xff] %v998
      %1003 = vst [vmem:[#allocation2 + $0xb8] sm:$0xff] %v1000
      %1004 = vrot.lane.b32.xlu0 %v912, 109
      %v1005 = vpop.permute.xlu0 %1004
      %1006 = vrot.lane.b32.xlu0 %v913, 109
      %v1007 = vpop.permute.xlu0 %1006
      %1008 = vrot.lane.b32.xlu0 %v914, 109
      %v1009 = vpop.permute.xlu0 %1008
      %v1010 = vsel %vm414, %v1007, %v1009
      %v1011 = vsel %vm414, %v1005, %v1007
      %v1012 = vsel %vm414, %v1009, %v1005
      %1013 = vst [vmem:[#allocation2 + $0xc0] sm:$0xff] %v1011
      %1014 = vst [vmem:[#allocation2 + $0xc8] sm:$0xff] %v1010
      %1015 = vst [vmem:[#allocation2 + $0xd0] sm:$0xff] %v1012
      %v1016 = vld [vmem:[#allocation2] sm:$0xff]
      %v1017 = vld [vmem:[#allocation2 + $0x8] sm:$0xff]
      %v1018 = vld [vmem:[#allocation2 + $0x10] sm:$0xff]
      %v1019 = vld [vmem:[#allocation2 + $0x18] sm:$0xff]
      %v1020 = vld [vmem:[#allocation2 + $0x20] sm:$0xff]
      %v1021 = vld [vmem:[#allocation2 + $0x28] sm:$0xff]
      %v1022 = vld [vmem:[#allocation2 + $0x30] sm:$0xff]
      %v1023 = vld [vmem:[#allocation2 + $0x38] sm:$0xff]
      %v1024 = vld [vmem:[#allocation2 + $0x40] sm:$0xff]
      %v1025 = vld [vmem:[#allocation2 + $0x48] sm:$0xff]
      %v1026 = vld [vmem:[#allocation2 + $0x50] sm:$0xff]
      %v1027 = vld [vmem:[#allocation2 + $0x58] sm:$0xff]
      %v1028 = vld [vmem:[#allocation2 + $0x60] sm:$0xff]
      %v1029 = vld [vmem:[#allocation2 + $0x68] sm:$0xff]
      %v1030 = vld [vmem:[#allocation2 + $0x70] sm:$0xff]
      %v1031 = vld [vmem:[#allocation2 + $0x78] sm:$0xff]
      %v1032 = vld [vmem:[#allocation2 + $0x80] sm:$0xff]
      %v1033 = vld [vmem:[#allocation2 + $0x88] sm:$0xff]
      %v1034 = vld [vmem:[#allocation2 + $0x90] sm:$0xff]
      %v1035 = vld [vmem:[#allocation2 + $0x98] sm:$0xff]
      %v1036 = vld [vmem:[#allocation2 + $0xa0] sm:$0xff]
      %v1037 = vld [vmem:[#allocation2 + $0xa8] sm:$0xff]
      %v1038 = vld [vmem:[#allocation2 + $0xb0] sm:$0xff]
      %v1039 = vld [vmem:[#allocation2 + $0xb8] sm:$0xff]
      %v1040 = vld [vmem:[#allocation2 + $0xc0] sm:$0xff]
      %v1041 = vld [vmem:[#allocation2 + $0xc8] sm:$0xff]
      %v1042 = vld [vmem:[#allocation2 + $0xd0] sm:$0xff]
      %1044 = vset.pattern.permute.xlu0 0
      %1045 = vperm.xlu0 %1044, %v916
      %v1046 = vpop.permute.xlu0 %1045
      %v1049 = vsel %vm453, %v915, 0
      %1051 = vmatprep.subr.mxu0 0.0
      %1052 = vmatpush1.msra.mxu0 0.0
      %1053 = vmatprep.subr.mxu0 0.0
      %1054 = vmatpush1.msra.mxu0 0.0
      %1055 = vmatprep.subr.mxu0 0.0
      %1056 = vmatpush1.msra.mxu0 0.0
      %1057 = vmatprep.subr.mxu0 0.0
      %1058 = vmatpush1.msra.mxu0 0.0
      %1059 = vmatprep.subr.mxu0 0.0
      %1060 = vmatpush1.msra.mxu0 0.0
      %1061 = vmatprep.subr.mxu0 0.0
      %1062 = vmatpush1.msra.mxu0 0.0
      %1063 = vmatprep.subr.mxu0 0.0
      %1064 = vmatpush1.msra.mxu0 0.0
      %1065 = vmatprep.subr.mxu0 %v1041
      %1066 = vmatpush1.msra.mxu0 %v1040
      %1067 = vmatprep.subr.mxu0 %v1038
      %1068 = vmatpush1.msra.mxu0 %v1037
      %1069 = vmatprep.subr.mxu0 %v1035
      %1070 = vmatpush1.msra.mxu0 %v1034
      %1071 = vmatprep.subr.mxu0 %v1032
      %1072 = vmatpush1.msra.mxu0 %v1031
      %1073 = vmatprep.subr.mxu0 %v1029
      %1074 = vmatpush1.msra.mxu0 %v1028
      %1075 = vmatprep.subr.mxu0 %v1026
      %1076 = vmatpush1.msra.mxu0 %v1025
      %1077 = vmatprep.subr.mxu0 %v1023
      %1078 = vmatpush1.msra.mxu0 %v1022
      %1079 = vmatprep.subr.mxu0 %v1020
      %1080 = vmatpush1.msra.mxu0 %v1019
      %1081 = vmatprep.subr.mxu0 %v1017
      %1082 = vmatpush1.msra.mxu0 %v1016
      %1083 = vmatprep.subr.mxu0 0.0
      %1084 = vmatpush2.msra.mxu0 0.0
      %1085 = vmatprep.subr.mxu0 0.0
      %1086 = vmatpush2.msra.mxu0 0.0
      %1087 = vmatprep.subr.mxu0 0.0
      %1088 = vmatpush2.msra.mxu0 0.0
      %1089 = vmatprep.subr.mxu0 0.0
      %1090 = vmatpush2.msra.mxu0 0.0
      %1091 = vmatprep.subr.mxu0 0.0
      %1092 = vmatpush2.msra.mxu0 0.0
      %1093 = vmatprep.subr.mxu0 0.0
      %1094 = vmatpush2.msra.mxu0 0.0
      %1095 = vmatprep.subr.mxu0 0.0
      %1096 = vmatpush2.msra.mxu0 0.0
      %1097 = vmatprep.subr.mxu0 0.0
      %1098 = vmatpush2.msra.mxu0 0.0
      %1099 = vmatprep.subr.mxu0 0.0
      %1100 = vmatpush2.msra.mxu0 0.0
      %1101 = vmatprep.subr.mxu0 0.0
      %1102 = vmatpush2.msra.mxu0 0.0
      %1103 = vmatprep.subr.mxu0 0.0
      %1104 = vmatpush2.msra.mxu0 0.0
      %1105 = vmatprep.subr.mxu0 0.0
      %1106 = vmatpush2.msra.mxu0 0.0
      %1107 = vmatprep.subr.mxu0 0.0
      %1108 = vmatpush2.msra.mxu0 0.0
      %1109 = vmatprep.subr.mxu0 0.0
      %1110 = vmatpush2.msra.mxu0 0.0
      %1111 = vmatprep.subr.mxu0 0.0
      %1112 = vmatpush2.msra.mxu0 0.0
      %1113 = vmatprep.subr.mxu0 0.0
      %1114 = vmatpush2.msra.mxu0 0.0
      %1115 = vmatprep.mubr.f32.mxu0 0.0
      %1116 = vmatmul.mubr.f32.gmra.mxu0 %v1049
      %v1117 = vpop.f32.mrf.mxu0
      %v1118 = vadd.f32 %v1046, %v1117
      %v1119 = vpop.f32.mrf.mxu0
      %v1120 = vadd.f32 %v1046, %v1119
      %1121 = vdwg.mxu0
      %1122 = vmatprep.subr.mxu0 0.0
      %1123 = vmatpush1.msra.mxu0 0.0
      %1124 = vmatprep.subr.mxu0 0.0
      %1125 = vmatpush1.msra.mxu0 0.0
      %1126 = vmatprep.subr.mxu0 0.0
      %1127 = vmatpush1.msra.mxu0 0.0
      %1128 = vmatprep.subr.mxu0 0.0
      %1129 = vmatpush1.msra.mxu0 0.0
      %1130 = vmatprep.subr.mxu0 0.0
      %1131 = vmatpush1.msra.mxu0 0.0
      %1132 = vmatprep.subr.mxu0 0.0
      %1133 = vmatpush1.msra.mxu0 0.0
      %1134 = vmatprep.subr.mxu0 0.0
      %1135 = vmatpush1.msra.mxu0 0.0
      %1136 = vmatprep.subr.mxu0 0.0
      %1137 = vmatpush1.msra.mxu0 %v1042
      %1138 = vmatprep.subr.mxu0 0.0
      %1139 = vmatpush1.msra.mxu0 %v1039
      %1140 = vmatprep.subr.mxu0 0.0
      %1141 = vmatpush1.msra.mxu0 %v1036
      %1142 = vmatprep.subr.mxu0 0.0
      %1143 = vmatpush1.msra.mxu0 %v1033
      %1144 = vmatprep.subr.mxu0 0.0
      %1145 = vmatpush1.msra.mxu0 %v1030
      %1146 = vmatprep.subr.mxu0 0.0
      %1147 = vmatpush1.msra.mxu0 %v1027
      %1148 = vmatprep.subr.mxu0 0.0
      %1149 = vmatpush1.msra.mxu0 %v1024
      %1150 = vmatprep.subr.mxu0 0.0
      %1151 = vmatpush1.msra.mxu0 %v1021
      %1152 = vmatprep.subr.mxu0 0.0
      %1153 = vmatpush1.msra.mxu0 %v1018
      %1154 = vmatprep.subr.mxu0 0.0
      %1155 = vmatpush2.msra.mxu0 0.0
      %1156 = vmatprep.subr.mxu0 0.0
      %1157 = vmatpush2.msra.mxu0 0.0
      %1158 = vmatprep.subr.mxu0 0.0
      %1159 = vmatpush2.msra.mxu0 0.0
      %1160 = vmatprep.subr.mxu0 0.0
      %1161 = vmatpush2.msra.mxu0 0.0
      %1162 = vmatprep.subr.mxu0 0.0
      %1163 = vmatpush2.msra.mxu0 0.0
      %1164 = vmatprep.subr.mxu0 0.0
      %1165 = vmatpush2.msra.mxu0 0.0
      %1166 = vmatprep.subr.mxu0 0.0
      %1167 = vmatpush2.msra.mxu0 0.0
      %1168 = vmatprep.subr.mxu0 0.0
      %1169 = vmatpush2.msra.mxu0 0.0
      %1170 = vmatprep.subr.mxu0 0.0
      %1171 = vmatpush2.msra.mxu0 0.0
      %1172 = vmatprep.subr.mxu0 0.0
      %1173 = vmatpush2.msra.mxu0 0.0
      %1174 = vmatprep.subr.mxu0 0.0
      %1175 = vmatpush2.msra.mxu0 0.0
      %1176 = vmatprep.subr.mxu0 0.0
      %1177 = vmatpush2.msra.mxu0 0.0
      %1178 = vmatprep.subr.mxu0 0.0
      %1179 = vmatpush2.msra.mxu0 0.0
      %1180 = vmatprep.subr.mxu0 0.0
      %1181 = vmatpush2.msra.mxu0 0.0
      %1182 = vmatprep.subr.mxu0 0.0
      %1183 = vmatpush2.msra.mxu0 0.0
      %1184 = vmatprep.subr.mxu0 0.0
      %1185 = vmatpush2.msra.mxu0 0.0
      %1186 = vmatprep.mubr.f32.mxu0 0.0
      %1187 = vmatmul.mubr.f32.gmra.mxu0 %v1049
      %v1188 = vpop.f32.mrf.mxu0
      %v1189 = vadd.f32 %v1046, %v1188
      %v1190 = vpop.f32.mrf.mxu0
      %1191 = vdwg.mxu0
      %vm1192 = vcmp.ge.f32.partialorder %v1118, 0.0
      %vm1193 = vcmp.ge.f32.partialorder %v1120, 0.0
      %vm1194 = vcmp.ge.f32.partialorder %v1189, 0.0
      %v1195 = vmul.f32 %v1118, 0.01
      %v1196 = vmul.f32 %v1120, 0.01
      %v1197 = vmul.f32 %v1189, 0.01
      %v1198 = vsel %vm1192, %v1118, %v1195
      %v1199 = vsel %vm1193, %v1120, %v1196
      %v1200 = vsel %vm1194, %v1189, %v1197
      %1201 = vst [vmem:[%s305] sm:$0xff] %v1198
      %1202 = vst [vmem:[%s305 + $0x8] sm:$0xff] %v1199
      %1203 = vst [vmem:[%s305 + $0x10] sm:$0xff] %v1200
      %p1204 = scmp.lt.s32.totalorder %s19, 1
      %s1205 = scalar_select %p1204, %s19, 1
      %s1206 = smul.addr %s1205, 3
      %s1207 = smul.addr %s1206, 8
      %s1208 = scalar_lea.vmem %s8, %s1207
      // Predicated region
      $region53: #{cnn_layer_forward.1} parent=51 // pred_check
        %p1209 = pneg %p210
      $region54: #{cnn_layer_forward.1} parent=51 // pred_check_branch
        %1211 = sbr.rel (%p1209) target = $region56
      $region55: #{cnn_layer_forward.1} parent=51 // pred_region
        _
      $region56: #{cnn_layer_forward.1} parent=51 // pred_fallthru
        _
    $region52: #{cnn_layer_forward.1} parent=5 // pred_fallthru
      _
    %p1212 = scmp.le.s32.totalorder 2, %s14
    // Predicated region
    $region57: #{cnn_layer_forward.1} parent=5 // pred_check
      %p1213 = pneg %p1212
    $region58: #{cnn_layer_forward.1} parent=5 // pred_check_branch
      %1215 = sbr.rel (%p1213) target = $region60
    $region59: #{cnn_layer_forward.1} parent=5 // pred_region
      %s1216 = ssub.s32 %s14, 2
      // Predicated region
      $region61: #{cnn_layer_forward.1} parent=59 // pred_check
        %p1217 = pneg %p216
      $region62: #{cnn_layer_forward.1} parent=59 // pred_check_branch
        %1219 = sbr.rel (%p1217) target = $region64
      $region63: #{cnn_layer_forward.1} parent=59 // pred_region
        %p1220 = scmp.lt.s32.totalorder %s20, 1
        %s1221 = scalar_select %p1220, %s20, 1
        %s1222 = smul.addr %s1221, 3
        %s1223 = smul.addr %s1222, 8
        %s1224 = scalar_lea.vmem %s8, %s1223
      $region64: #{cnn_layer_forward.1} parent=59 // pred_fallthru
        _
    $region60: #{cnn_layer_forward.1} parent=5 // pred_fallthru
      _
  $region6: #{cnn_layer_forward.1} parent=0 // loop_footer
    %s18 = sadd.s32 1, %s14
  $region7: #{cnn_layer_forward.1} parent=0 // loop_footer_branch
    %13 = sbr.rel target = $region3
  $region8: #{cnn_layer_forward.1} parent=0 // loop_exit
    _

</llo_original>
